<compile_context>
chip_gen: v6e
topology: v6e:2x2x1
jax: 0.10.0
libtpu: 0.0.40
codegen_flags: <defaults>
</compile_context>

<pallas_src>
import functools
import math

import jax
import jax.numpy as jnp
from jax import lax
from jax.experimental import pallas as pl
from jax.experimental.pallas import tpu as pltpu


# ----------------------------- shared math ------------------------------------


def _layernorm(x, gamma, beta, eps=1e-5):
    mu = jnp.mean(x, axis=-1, keepdims=True)
    var = jnp.mean((x - mu) ** 2, axis=-1, keepdims=True)
    return (x - mu) * lax.rsqrt(var + eps) * gamma + beta


def _gelu_exact(x):
    # exact erf-based GELU, matching torch.nn.GELU default
    return 0.5 * x * (1.0 + lax.erf(x * (1.0 / math.sqrt(2.0))))


# ----------------------------- fused kernel -----------------------------------


def transformer_kernel(x_ref,
                       ag_ref, ab_ref, wq_ref, wk_ref, wv_ref, wo_ref, bo_ref,
                       fg_ref, fb_ref, w1_ref, b1_ref, w2_ref, b2_ref,
                       o_ref,
                       y_ref, cat_ref,
                       *, heads, dim_head, mxu_dtype):
    """One (batch, layer) grid step.  Residual stays resident in VMEM scratch."""
    l = pl.program_id(1)
    f32 = jnp.float32

    @pl.when(l == 0)
    def _():
        y_ref[...] = x_ref[0].astype(f32)

    y = y_ref[...]                                                     # (N, D)

    # ---------- PreNorm(MultiHeadSelfAttention) + residual --------------------
    xn = _layernorm(y, ag_ref[...], ab_ref[...]).astype(mxu_dtype)     # (N, D)
    # Head-major q/k/v straight out of the matmul (no lane slicing / stacking).
    # Softmax scale is already folded into wq by the wrapper.
    xh = jnp.broadcast_to(xn, (heads,) + xn.shape)                     # (H, N, D)
    q = jnp.einsum("hnd,hdf->hnf", xh, wq_ref[...],
                   preferred_element_type=f32)                         # (H, N, dh)
    k = jnp.einsum("hnd,hdf->hnf", xh, wk_ref[...],
                   preferred_element_type=f32)
    v = jnp.einsum("hnd,hdf->hnf", xh, wv_ref[...],
                   preferred_element_type=f32)

    # TODO(synk): at large N switch to flash-style KV tiling (online softmax)
    # so the (H, N, N) f32 score block stays within v7x's 64 MiB VMEM.
    dots = jnp.einsum("hqd,hkd->hqk", q.astype(mxu_dtype), k.astype(mxu_dtype),
                      preferred_element_type=f32)                      # (H, N, N)
    dots = dots - jnp.max(dots, axis=-1, keepdims=True)
    p = jnp.exp(dots)
    p = p * pl.reciprocal(jnp.sum(p, axis=-1, keepdims=True), approx=True)

    attn = jnp.einsum("hqk,hkd->hqd", p.astype(mxu_dtype), v.astype(mxu_dtype),
                      preferred_element_type=f32)                      # (H, N, dh)

    # Output projection with the head reduction fused into MXU accumulation:
    # heads are laid side-by-side in a lane-major (N, inner) scratch, then one
    # K = inner matmul.  (A multi-contracting-dim dot_general does not lower on
    # Mosaic, hence the concat via static lane-slice stores.)
    for h in range(heads):                      # static, tiny
        cat_ref[:, h * dim_head:(h + 1) * dim_head] = attn[h].astype(mxu_dtype)
    proj = jnp.dot(cat_ref[...], wo_ref[...], preferred_element_type=f32)
    y = y + proj + bo_ref[...]

    # ---------- PreNorm(FeedForward) + residual --------------------------------
    xn = _layernorm(y, fg_ref[...], fb_ref[...]).astype(mxu_dtype)
    h1 = jnp.dot(xn, w1_ref[...], preferred_element_type=f32) + b1_ref[...]
    h1 = _gelu_exact(h1)
    y = y + jnp.dot(h1.astype(mxu_dtype), w2_ref[...],
                    preferred_element_type=f32) + b2_ref[...]

    y_ref[...] = y

    @pl.when(l == pl.num_programs(1) - 1)
    def _():
        o_ref[0] = y_ref[...].astype(o_ref.dtype)


# ----------------------------- wrapper -----------------------------------------


def transformer_forward(x, params, *, heads, dim_head, mxu_dtype=jnp.bfloat16):
    """params: list (per layer) of dicts with attn/ff parameters (f32)."""
    B, N, D = x.shape
    depth = len(params)
    inner = heads * dim_head
    mlp_dim = params[0]["w1"].shape[-1]
    scale = dim_head ** (-0.5)

    def stack(name):
        return jnp.stack([p[name] for p in params], axis=0)

    # --- per-layer parameter slabs, stacked along a leading depth axis ---------
    wqkv = stack("wqkv")                                        # (depth, D, 3*inner)

    def head_major(cols, s=1.0):
        w = wqkv[:, :, cols] * s                                # (depth, D, inner)
        return (w.reshape(depth, D, heads, dim_head)
                 .transpose(0, 2, 1, 3)                         # (depth, H, D, dh)
                 .astype(mxu_dtype))

    wq = head_major(slice(0, inner), scale)     # softmax scale folded into Q
    wk = head_major(slice(inner, 2 * inner))
    wv = head_major(slice(2 * inner, 3 * inner))
    wo = stack("wo").astype(mxu_dtype)                          # (depth, inner, D)

    ag, ab = stack("attn_ln_g"), stack("attn_ln_b")             # (depth, 1, D)
    bo = stack("bo")                                            # (depth, 1, D)
    fg, fb = stack("ff_ln_g"), stack("ff_ln_b")
    w1 = stack("w1").astype(mxu_dtype)                          # (depth, D, mlp)
    b1 = stack("b1")                                            # (depth, 1, mlp)
    w2 = stack("w2").astype(mxu_dtype)                          # (depth, mlp, D)
    b2 = stack("b2")

    layer_params = (ag, ab, wq, wk, wv, wo, bo, fg, fb, w1, b1, w2, b2)

    def layer_spec(a):
        # One layer's slab per grid step; leading depth dim squeezed away.
        # Weights change every layer step, so default double-buffering gives
        # automatic layer-(l+1) prefetch behind layer-l compute.
        nd = a.ndim
        return pl.BlockSpec((pl.Squeezed(),) + tuple(a.shape[1:]),
                            lambda b, l, _nd=nd: (l,) + (0,) * (_nd - 1))

    # --- VMEM budget (double-buffered blocks + scratch + headroom) -------------
    def _nbytes(a):
        return int(a.size) * a.dtype.itemsize

    per_layer_bytes = sum(_nbytes(a) // depth for a in layer_params)
    act_block_bytes = N * D * x.dtype.itemsize
    scratch_bytes = N * D * 4 + N * inner * jnp.dtype(mxu_dtype).itemsize
    vmem_limit = 2 * (per_layer_bytes + 2 * act_block_bytes) + scratch_bytes + (8 << 20)
    vmem_limit = int(min(max(vmem_limit, 16 << 20), 32 << 20))

    # --- advisory cost estimate -------------------------------------------------
    flops_layer = (2 * N * D * 3 * inner            # qkv projection
                   + 2 * heads * N * N * dim_head   # scores
                   + 2 * heads * N * N * dim_head   # attn @ v
                   + 2 * N * inner * D              # output projection
                   + 2 * N * D * mlp_dim            # ff up
                   + 2 * N * mlp_dim * D)           # ff down
    transc_layer = heads * N * N + N * mlp_dim + heads * N + 4 * N
    bytes_accessed = int(2 * x.size * x.dtype.itemsize
                         + B * sum(_nbytes(a) for a in layer_params))
    cost = pl.CostEstimate(flops=int(B * depth * flops_layer),
                           transcendentals=int(B * depth * transc_layer),
                           bytes_accessed=bytes_accessed)

    kernel = functools.partial(transformer_kernel, heads=heads,
                               dim_head=dim_head, mxu_dtype=mxu_dtype)

    # NOTE(perf): at real model sizes also tile N (grid=(B, N//tq, depth)) and
    # pad D / mlp_dim to multiples of 128 so the output stays lane-dense; at
    # this toy size the blocks already equal the full array extents.
    return pl.pallas_call(
        kernel,
        out_shape=jax.ShapeDtypeStruct((B, N, D), x.dtype),
        grid_spec=pltpu.PrefetchScalarGridSpec(
            num_scalar_prefetch=0,
            grid=(B, depth),               # batch parallel, layers sequential
            in_specs=[pl.BlockSpec((1, N, D), lambda b, l: (b, 0, 0))]
                     + [layer_spec(a) for a in layer_params],
            out_specs=pl.BlockSpec((1, N, D), lambda b, l: (b, 0, 0)),
            scratch_shapes=[pltpu.VMEM((N, D), jnp.float32),      # residual y
                            pltpu.VMEM((N, inner), mxu_dtype)],   # head concat
        ),
        compiler_params=pltpu.CompilerParams(
            dimension_semantics=("parallel", "arbitrary"),
            vmem_limit_bytes=vmem_limit),
        cost_estimate=cost,
    )(x, *layer_params)


# ----------------------------- reference (pure JAX) -----------------------------


def _reference_forward(x, params, *, heads, dim_head, mxu_dtype=jnp.bfloat16):
    """Torch-faithful math with the same bf16-at-MXU-inputs / f32-accumulate policy."""
    inner = heads * dim_head
    scale = dim_head ** (-0.5)
    B, N, D = x.shape
    f32 = jnp.float32

    def mm(a, w):
        return jnp.matmul(a.astype(mxu_dtype), w.astype(mxu_dtype),
                          preferred_element_type=f32)

    for layer in params:
        xn = _layernorm(x, layer["attn_ln_g"], layer["attn_ln_b"])
        qkv = mm(xn, layer["wqkv"])
        q, k, v = jnp.split(qkv, 3, axis=-1)

        def to_heads(t):
            return t.reshape(B, N, heads, dim_head).transpose(0, 2, 1, 3)

        q, k, v = map(to_heads, (q, k, v))
        dots = jnp.einsum("bhid,bhjd->bhij",
                          q.astype(mxu_dtype), k.astype(mxu_dtype),
                          preferred_element_type=f32) * scale
        attn = jax.nn.softmax(dots, axis=-1)
        out = jnp.einsum("bhij,bhjd->bhid",
                         attn.astype(mxu_dtype), v.astype(mxu_dtype),
                         preferred_element_type=f32)
        out = out.transpose(0, 2, 1, 3).reshape(B, N, inner)
        x = mm(out, layer["wo"]) + layer["bo"] + x

        xn = _layernorm(x, layer["ff_ln_g"], layer["ff_ln_b"])
        h = mm(xn, layer["w1"]) + layer["b1"]
        h = _gelu_exact(h)
        x = mm(h, layer["w2"]) + layer["b2"] + x
    return x


# ----------------------------- main ---------------------------------------------


if __name__ == "__main__":
    B, N, D = 2, 8, 32          # batch, sequence, embedding dim
    HEADS, DH = 4, 16           # heads, dim per head
    INNER = HEADS * DH          # 64
    MLP = 64                    # mlp_dim
    DEPTH = 2

    key = jax.random.PRNGKey(0)
    key, kx = jax.random.split(key)
    x = jax.random.normal(kx, (B, N, D), dtype=jnp.float32)

    params = []
    for _ in range(DEPTH):
        key, k1, k2, k3, k4 = jax.random.split(key, 5)
        params.append({
            "attn_ln_g": jnp.ones((1, D), jnp.float32),
            "attn_ln_b": jnp.zeros((1, D), jnp.float32),
            "wqkv": 0.05 * jax.random.normal(k1, (D, 3 * INNER), jnp.float32),
            "wo": 0.05 * jax.random.normal(k2, (INNER, D), jnp.float32),
            "bo": jnp.zeros((1, D), jnp.float32),
            "ff_ln_g": jnp.ones((1, D), jnp.float32),
            "ff_ln_b": jnp.zeros((1, D), jnp.float32),
            "w1": 0.05 * jax.random.normal(k3, (D, MLP), jnp.float32),
            "b1": jnp.zeros((1, MLP), jnp.float32),
            "w2": 0.05 * jax.random.normal(k4, (MLP, D), jnp.float32),
            "b2": jnp.zeros((1, D), jnp.float32),
        })

    out = transformer_forward(x, params, heads=HEADS, dim_head=DH,
                              mxu_dtype=jnp.bfloat16)
    out = jax.block_until_ready(out)

    ref = _reference_forward(x, params, heads=HEADS, dim_head=DH,
                             mxu_dtype=jnp.bfloat16)
    assert out.shape == (B, N, D)
    max_err = float(jnp.max(jnp.abs(out - ref)))
    assert jnp.allclose(out, ref, atol=2e-3, rtol=2e-3), (
        f"Pallas output mismatch vs JAX reference (max abs err {max_err})")

    print("KERNEL_OK")
</pallas_src>

<mosaic_0001>
module attributes {stable_mosaic.version = 11 : i64} {
  func.func @transformer_kernel(%arg0: i32, %arg1: i32, %arg2: memref<1x8x32xf32, #tpu.memory_space<vmem>>, %arg3: memref<1x1x32xf32, #tpu.memory_space<vmem>>, %arg4: memref<1x1x32xf32, #tpu.memory_space<vmem>>, %arg5: memref<1x4x32x16xbf16, #tpu.memory_space<vmem>>, %arg6: memref<1x4x32x16xbf16, #tpu.memory_space<vmem>>, %arg7: memref<1x4x32x16xbf16, #tpu.memory_space<vmem>>, %arg8: memref<1x64x32xbf16, #tpu.memory_space<vmem>>, %arg9: memref<1x1x32xf32, #tpu.memory_space<vmem>>, %arg10: memref<1x1x32xf32, #tpu.memory_space<vmem>>, %arg11: memref<1x1x32xf32, #tpu.memory_space<vmem>>, %arg12: memref<1x32x64xbf16, #tpu.memory_space<vmem>>, %arg13: memref<1x1x64xf32, #tpu.memory_space<vmem>>, %arg14: memref<1x64x32xbf16, #tpu.memory_space<vmem>>, %arg15: memref<1x1x32xf32, #tpu.memory_space<vmem>>, %arg16: memref<1x8x32xf32, #tpu.memory_space<vmem>>, %arg17: memref<8x32xf32, #tpu.memory_space<vmem>>, %arg18: memref<8x64xbf16, #tpu.memory_space<vmem>>) attributes {dimension_semantics = [#tpu.dimension_semantics<parallel>, #tpu.dimension_semantics<arbitrary>], iteration_bounds = array<i64: 2, 2>, scalar_prefetch = 0 : i64, scratch_operands = 2 : i64, tpu.core_type = #tpu.core_type<tc>, window_params = [{transform_indices = @transform_0, window_bounds = array<i64: 1, 8, 32>}, {transform_indices = @transform_1, window_bounds = array<i64: 1, 1, 32>}, {transform_indices = @transform_2, window_bounds = array<i64: 1, 1, 32>}, {transform_indices = @transform_3, window_bounds = array<i64: 1, 4, 32, 16>}, {transform_indices = @transform_4, window_bounds = array<i64: 1, 4, 32, 16>}, {transform_indices = @transform_5, window_bounds = array<i64: 1, 4, 32, 16>}, {transform_indices = @transform_6, window_bounds = array<i64: 1, 64, 32>}, {transform_indices = @transform_7, window_bounds = array<i64: 1, 1, 32>}, {transform_indices = @transform_8, window_bounds = array<i64: 1, 1, 32>}, {transform_indices = @transform_9, window_bounds = array<i64: 1, 1, 32>}, {transform_indices = @transform_10, window_bounds = array<i64: 1, 32, 64>}, {transform_indices = @transform_11, window_bounds = array<i64: 1, 1, 64>}, {transform_indices = @transform_12, window_bounds = array<i64: 1, 64, 32>}, {transform_indices = @transform_13, window_bounds = array<i64: 1, 1, 32>}, {transform_indices = @transform_14, window_bounds = array<i64: 1, 8, 32>}]} {
    %c0_i32 = arith.constant 0 : i32
    %0 = arith.cmpi eq, %arg1, %c0_i32 : i32
    %1 = arith.extui %0 : i1 to i32
    %c0_i32_0 = arith.constant 0 : i32
    %2 = arith.cmpi ne, %1, %c0_i32_0 : i32
    scf.if %2 {
      %c0_76 = arith.constant 0 : index
      %c0_77 = arith.constant 0 : index
      %c0_78 = arith.constant 0 : index
      %138 = vector.load %arg2[%c0_76, %c0_77, %c0_78] : memref<1x8x32xf32, #tpu.memory_space<vmem>>, vector<1x8x32xf32>
      %139 = vector.shape_cast %138 : vector<1x8x32xf32> to vector<8x32xf32>
      %c0_79 = arith.constant 0 : index
      %c0_80 = arith.constant 0 : index
      %140 = vector.load %arg17[%c0_79, %c0_80] : memref<8x32xf32, #tpu.memory_space<vmem>>, vector<8x32xf32>
      tpu.vector_store %arg17[%c0_79, %c0_80], %139 {strides = array<i32>} : memref<8x32xf32, #tpu.memory_space<vmem>>, vector<8x32xf32>,
    } else {
    }
    %c0 = arith.constant 0 : index
    %c0_1 = arith.constant 0 : index
    %3 = vector.load %arg17[%c0, %c0_1] : memref<8x32xf32, #tpu.memory_space<vmem>>, vector<8x32xf32>
    %c0_2 = arith.constant 0 : index
    %c0_3 = arith.constant 0 : index
    %c0_4 = arith.constant 0 : index
    %4 = vector.load %arg3[%c0_2, %c0_3, %c0_4] : memref<1x1x32xf32, #tpu.memory_space<vmem>>, vector<1x1x32xf32>
    %5 = vector.shape_cast %4 : vector<1x1x32xf32> to vector<1x32xf32>
    %c0_5 = arith.constant 0 : index
    %c0_6 = arith.constant 0 : index
    %c0_7 = arith.constant 0 : index
    %6 = vector.load %arg4[%c0_5, %c0_6, %c0_7] : memref<1x1x32xf32, #tpu.memory_space<vmem>>, vector<1x1x32xf32>
    %7 = vector.shape_cast %6 : vector<1x1x32xf32> to vector<1x32xf32>
    %cst = arith.constant dense<0.000000e+00> : vector<8xf32>
    %8 = vector.multi_reduction <add>, %3, %cst [1] : vector<8x32xf32> to vector<8xf32>
    %9 = vector.shape_cast %8 : vector<8xf32> to vector<8x1xf32>
    %cst_8 = arith.constant 3.200000e+01 : f32
    %10 = vector.broadcast %cst_8 : f32 to vector<8x1xf32>
    %11 = arith.divf %9, %10 : vector<8x1xf32>
    %12 = vector.broadcast %11 : vector<8x1xf32> to vector<8x32xf32>
    %13 = arith.subf %3, %12 : vector<8x32xf32>
    %14 = arith.mulf %13, %13 : vector<8x32xf32>
    %cst_9 = arith.constant dense<0.000000e+00> : vector<8xf32>
    %15 = vector.multi_reduction <add>, %14, %cst_9 [1] : vector<8x32xf32> to vector<8xf32>
    %16 = vector.shape_cast %15 : vector<8xf32> to vector<8x1xf32>
    %cst_10 = arith.constant 3.200000e+01 : f32
    %17 = vector.broadcast %cst_10 : f32 to vector<8x1xf32>
    %18 = arith.divf %16, %17 : vector<8x1xf32>
    %19 = vector.broadcast %11 : vector<8x1xf32> to vector<8x32xf32>
    %20 = arith.subf %3, %19 : vector<8x32xf32>
    %cst_11 = arith.constant 9.99999974E-6 : f32
    %21 = vector.broadcast %cst_11 : f32 to vector<8x1xf32>
    %22 = arith.addf %18, %21 : vector<8x1xf32>
    %23 = math.rsqrt %22 : vector<8x1xf32>
    %24 = vector.broadcast %23 : vector<8x1xf32> to vector<8x32xf32>
    %25 = arith.mulf %20, %24 : vector<8x32xf32>
    %26 = vector.broadcast %5 : vector<1x32xf32> to vector<8x32xf32>
    %27 = arith.mulf %25, %26 : vector<8x32xf32>
    %28 = vector.broadcast %7 : vector<1x32xf32> to vector<8x32xf32>
    %29 = arith.addf %27, %28 : vector<8x32xf32>
    %30 = arith.truncf %29 : vector<8x32xf32> to vector<8x32xbf16>
    %31 = vector.shape_cast %30 : vector<8x32xbf16> to vector<1x8x32xbf16>
    %32 = vector.broadcast %31 : vector<1x8x32xbf16> to vector<4x8x32xbf16>
    %c0_12 = arith.constant 0 : index
    %c0_13 = arith.constant 0 : index
    %c0_14 = arith.constant 0 : index
    %c0_15 = arith.constant 0 : index
    %33 = vector.load %arg5[%c0_12, %c0_13, %c0_14, %c0_15] : memref<1x4x32x16xbf16, #tpu.memory_space<vmem>>, vector<1x4x32x16xbf16>
    %34 = vector.shape_cast %33 : vector<1x4x32x16xbf16> to vector<4x32x16xbf16>
    "tpu.trace_start"() <{level = 10 : i32, message = "hnd,hdf->hnf"}> : () -> ()
    %cst_16 = arith.constant dense<0.000000e+00> : vector<4x8x16xf32>
    %35 = tpu.matmul %32, %34, %cst_16 {dimension_numbers = #tpu.dot_dimension_numbers<[2], [1], [1], [2], [0, 0, 0, 1, 1, 2], [0], [0]>} : vector<4x8x32xbf16>, vector<4x32x16xbf16>, vector<4x8x16xf32> -> vector<4x8x16xf32>
    "tpu.trace_stop"() : () -> ()
    %c0_17 = arith.constant 0 : index
    %c0_18 = arith.constant 0 : index
    %c0_19 = arith.constant 0 : index
    %c0_20 = arith.constant 0 : index
    %36 = vector.load %arg6[%c0_17, %c0_18, %c0_19, %c0_20] : memref<1x4x32x16xbf16, #tpu.memory_space<vmem>>, vector<1x4x32x16xbf16>
    %37 = vector.shape_cast %36 : vector<1x4x32x16xbf16> to vector<4x32x16xbf16>
    "tpu.trace_start"() <{level = 10 : i32, message = "hnd,hdf->hnf"}> : () -> ()
    %cst_21 = arith.constant dense<0.000000e+00> : vector<4x8x16xf32>
    %38 = tpu.matmul %32, %37, %cst_21 {dimension_numbers = #tpu.dot_dimension_numbers<[2], [1], [1], [2], [0, 0, 0, 1, 1, 2], [0], [0]>} : vector<4x8x32xbf16>, vector<4x32x16xbf16>, vector<4x8x16xf32> -> vector<4x8x16xf32>
    "tpu.trace_stop"() : () -> ()
    %c0_22 = arith.constant 0 : index
    %c0_23 = arith.constant 0 : index
    %c0_24 = arith.constant 0 : index
    %c0_25 = arith.constant 0 : index
    %39 = vector.load %arg7[%c0_22, %c0_23, %c0_24, %c0_25] : memref<1x4x32x16xbf16, #tpu.memory_space<vmem>>, vector<1x4x32x16xbf16>
    %40 = vector.shape_cast %39 : vector<1x4x32x16xbf16> to vector<4x32x16xbf16>
    "tpu.trace_start"() <{level = 10 : i32, message = "hnd,hdf->hnf"}> : () -> ()
    %cst_26 = arith.constant dense<0.000000e+00> : vector<4x8x16xf32>
    %41 = tpu.matmul %32, %40, %cst_26 {dimension_numbers = #tpu.dot_dimension_numbers<[2], [1], [1], [2], [0, 0, 0, 1, 1, 2], [0], [0]>} : vector<4x8x32xbf16>, vector<4x32x16xbf16>, vector<4x8x16xf32> -> vector<4x8x16xf32>
    "tpu.trace_stop"() : () -> ()
    %42 = arith.truncf %35 : vector<4x8x16xf32> to vector<4x8x16xbf16>
    %43 = arith.truncf %38 : vector<4x8x16xf32> to vector<4x8x16xbf16>
    "tpu.trace_start"() <{level = 10 : i32, message = "hqd,hkd->hqk"}> : () -> ()
    %cst_27 = arith.constant dense<0.000000e+00> : vector<4x8x8xf32>
    %44 = tpu.matmul %42, %43, %cst_27 {dimension_numbers = #tpu.dot_dimension_numbers<[2], [2], [1], [1], [0, 0, 0, 1, 1, 1], [0], [0]>} : vector<4x8x16xbf16>, vector<4x8x16xbf16>, vector<4x8x8xf32> -> vector<4x8x8xf32>
    "tpu.trace_stop"() : () -> ()
    %cst_28 = arith.constant dense<0xFF800000> : vector<4x8xf32>
    %45 = vector.multi_reduction <maximumf>, %44, %cst_28 [2] : vector<4x8x8xf32> to vector<4x8xf32>
    %46 = vector.shape_cast %45 : vector<4x8xf32> to vector<4x8x1xf32>
    %47 = vector.broadcast %46 : vector<4x8x1xf32> to vector<4x8x8xf32>
    %48 = arith.subf %44, %47 : vector<4x8x8xf32>
    %49 = math.exp %48 : vector<4x8x8xf32>
    %cst_29 = arith.constant dense<0.000000e+00> : vector<4x8xf32>
    %50 = vector.multi_reduction <add>, %49, %cst_29 [2] : vector<4x8x8xf32> to vector<4x8xf32>
    %51 = vector.shape_cast %50 : vector<4x8xf32> to vector<4x8x1xf32>
    %52 = tpu.reciprocal %51 {approx = true} : vector<4x8x1xf32> -> vector<4x8x1xf32>
    %53 = vector.broadcast %52 : vector<4x8x1xf32> to vector<4x8x8xf32>
    %54 = arith.mulf %49, %53 : vector<4x8x8xf32>
    %55 = arith.truncf %54 : vector<4x8x8xf32> to vector<4x8x8xbf16>
    %56 = arith.truncf %41 : vector<4x8x16xf32> to vector<4x8x16xbf16>
    "tpu.trace_start"() <{level = 10 : i32, message = "hqk,hkd->hqd"}> : () -> ()
    %cst_30 = arith.constant dense<0.000000e+00> : vector<4x8x16xf32>
    %57 = tpu.matmul %55, %56, %cst_30 {dimension_numbers = #tpu.dot_dimension_numbers<[2], [1], [1], [2], [0, 0, 0, 1, 1, 2], [0], [0]>} : vector<4x8x8xbf16>, vector<4x8x16xbf16>, vector<4x8x16xf32> -> vector<4x8x16xf32>
    "tpu.trace_stop"() : () -> ()
    %58 = vector.extract_strided_slice %57 {offsets = [0, 0, 0], sizes = [1, 8, 16], strides = [1, 1, 1]} : vector<4x8x16xf32> to vector<1x8x16xf32>
    %59 = vector.shape_cast %58 : vector<1x8x16xf32> to vector<8x16xf32>
    %60 = arith.truncf %59 : vector<8x16xf32> to vector<8x16xbf16>
    %c0_31 = arith.constant 0 : index
    %c0_32 = arith.constant 0 : index
    %61 = vector.load %arg18[%c0_31, %c0_32] : memref<8x64xbf16, #tpu.memory_space<vmem>>, vector<8x16xbf16>
    tpu.vector_store %arg18[%c0_31, %c0_32], %60 {strides = array<i32>} : memref<8x64xbf16, #tpu.memory_space<vmem>>, vector<8x16xbf16>,
    %62 = vector.extract_strided_slice %57 {offsets = [1, 0, 0], sizes = [1, 8, 16], strides = [1, 1, 1]} : vector<4x8x16xf32> to vector<1x8x16xf32>
    %63 = vector.shape_cast %62 : vector<1x8x16xf32> to vector<8x16xf32>
    %64 = arith.truncf %63 : vector<8x16xf32> to vector<8x16xbf16>
    %c0_33 = arith.constant 0 : index
    %c16 = arith.constant 16 : index
    %65 = vector.load %arg18[%c0_33, %c16] : memref<8x64xbf16, #tpu.memory_space<vmem>>, vector<8x16xbf16>
    tpu.vector_store %arg18[%c0_33, %c16], %64 {strides = array<i32>} : memref<8x64xbf16, #tpu.memory_space<vmem>>, vector<8x16xbf16>,
    %66 = vector.extract_strided_slice %57 {offsets = [2, 0, 0], sizes = [1, 8, 16], strides = [1, 1, 1]} : vector<4x8x16xf32> to vector<1x8x16xf32>
    %67 = vector.shape_cast %66 : vector<1x8x16xf32> to vector<8x16xf32>
    %68 = arith.truncf %67 : vector<8x16xf32> to vector<8x16xbf16>
    %c0_34 = arith.constant 0 : index
    %c32 = arith.constant 32 : index
    %69 = vector.load %arg18[%c0_34, %c32] : memref<8x64xbf16, #tpu.memory_space<vmem>>, vector<8x16xbf16>
    tpu.vector_store %arg18[%c0_34, %c32], %68 {strides = array<i32>} : memref<8x64xbf16, #tpu.memory_space<vmem>>, vector<8x16xbf16>,
    %70 = vector.extract_strided_slice %57 {offsets = [3, 0, 0], sizes = [1, 8, 16], strides = [1, 1, 1]} : vector<4x8x16xf32> to vector<1x8x16xf32>
    %71 = vector.shape_cast %70 : vector<1x8x16xf32> to vector<8x16xf32>
    %72 = arith.truncf %71 : vector<8x16xf32> to vector<8x16xbf16>
    %c0_35 = arith.constant 0 : index
    %c48 = arith.constant 48 : index
    %73 = vector.load %arg18[%c0_35, %c48] : memref<8x64xbf16, #tpu.memory_space<vmem>>, vector<8x16xbf16>
    tpu.vector_store %arg18[%c0_35, %c48], %72 {strides = array<i32>} : memref<8x64xbf16, #tpu.memory_space<vmem>>, vector<8x16xbf16>,
    %c0_36 = arith.constant 0 : index
    %c0_37 = arith.constant 0 : index
    %74 = vector.load %arg18[%c0_36, %c0_37] : memref<8x64xbf16, #tpu.memory_space<vmem>>, vector<8x64xbf16>
    %c0_38 = arith.constant 0 : index
    %c0_39 = arith.constant 0 : index
    %c0_40 = arith.constant 0 : index
    %75 = vector.load %arg8[%c0_38, %c0_39, %c0_40] : memref<1x64x32xbf16, #tpu.memory_space<vmem>>, vector<1x64x32xbf16>
    %76 = vector.shape_cast %75 : vector<1x64x32xbf16> to vector<64x32xbf16>
    %cst_41 = arith.constant dense<0.000000e+00> : vector<8x32xf32>
    %77 = tpu.matmul %74, %76, %cst_41 {dimension_numbers = #tpu.dot_dimension_numbers<[1], [0], [0], [1], [0, 0, 1, 1], [], []>} : vector<8x64xbf16>, vector<64x32xbf16>, vector<8x32xf32> -> vector<8x32xf32>
    %78 = arith.addf %3, %77 : vector<8x32xf32>
    %c0_42 = arith.constant 0 : index
    %c0_43 = arith.constant 0 : index
    %c0_44 = arith.constant 0 : index
    %79 = vector.load %arg9[%c0_42, %c0_43, %c0_44] : memref<1x1x32xf32, #tpu.memory_space<vmem>>, vector<1x1x32xf32>
    %80 = vector.shape_cast %79 : vector<1x1x32xf32> to vector<1x32xf32>
    %81 = vector.broadcast %80 : vector<1x32xf32> to vector<8x32xf32>
    %82 = arith.addf %78, %81 : vector<8x32xf32>
    %c0_45 = arith.constant 0 : index
    %c0_46 = arith.constant 0 : index
    %c0_47 = arith.constant 0 : index
    %83 = vector.load %arg10[%c0_45, %c0_46, %c0_47] : memref<1x1x32xf32, #tpu.memory_space<vmem>>, vector<1x1x32xf32>
    %84 = vector.shape_cast %83 : vector<1x1x32xf32> to vector<1x32xf32>
    %c0_48 = arith.constant 0 : index
    %c0_49 = arith.constant 0 : index
    %c0_50 = arith.constant 0 : index
    %85 = vector.load %arg11[%c0_48, %c0_49, %c0_50] : memref<1x1x32xf32, #tpu.memory_space<vmem>>, vector<1x1x32xf32>
    %86 = vector.shape_cast %85 : vector<1x1x32xf32> to vector<1x32xf32>
    %cst_51 = arith.constant dense<0.000000e+00> : vector<8xf32>
    %87 = vector.multi_reduction <add>, %82, %cst_51 [1] : vector<8x32xf32> to vector<8xf32>
    %88 = vector.shape_cast %87 : vector<8xf32> to vector<8x1xf32>
    %cst_52 = arith.constant 3.200000e+01 : f32
    %89 = vector.broadcast %cst_52 : f32 to vector<8x1xf32>
    %90 = arith.divf %88, %89 : vector<8x1xf32>
    %91 = vector.broadcast %90 : vector<8x1xf32> to vector<8x32xf32>
    %92 = arith.subf %82, %91 : vector<8x32xf32>
    %93 = arith.mulf %92, %92 : vector<8x32xf32>
    %cst_53 = arith.constant dense<0.000000e+00> : vector<8xf32>
    %94 = vector.multi_reduction <add>, %93, %cst_53 [1] : vector<8x32xf32> to vector<8xf32>
    %95 = vector.shape_cast %94 : vector<8xf32> to vector<8x1xf32>
    %cst_54 = arith.constant 3.200000e+01 : f32
    %96 = vector.broadcast %cst_54 : f32 to vector<8x1xf32>
    %97 = arith.divf %95, %96 : vector<8x1xf32>
    %98 = vector.broadcast %90 : vector<8x1xf32> to vector<8x32xf32>
    %99 = arith.subf %82, %98 : vector<8x32xf32>
    %cst_55 = arith.constant 9.99999974E-6 : f32
    %100 = vector.broadcast %cst_55 : f32 to vector<8x1xf32>
    %101 = arith.addf %97, %100 : vector<8x1xf32>
    %102 = math.rsqrt %101 : vector<8x1xf32>
    %103 = vector.broadcast %102 : vector<8x1xf32> to vector<8x32xf32>
    %104 = arith.mulf %99, %103 : vector<8x32xf32>
    %105 = vector.broadcast %84 : vector<1x32xf32> to vector<8x32xf32>
    %106 = arith.mulf %104, %105 : vector<8x32xf32>
    %107 = vector.broadcast %86 : vector<1x32xf32> to vector<8x32xf32>
    %108 = arith.addf %106, %107 : vector<8x32xf32>
    %109 = arith.truncf %108 : vector<8x32xf32> to vector<8x32xbf16>
    %c0_56 = arith.constant 0 : index
    %c0_57 = arith.constant 0 : index
    %c0_58 = arith.constant 0 : index
    %110 = vector.load %arg12[%c0_56, %c0_57, %c0_58] : memref<1x32x64xbf16, #tpu.memory_space<vmem>>, vector<1x32x64xbf16>
    %111 = vector.shape_cast %110 : vector<1x32x64xbf16> to vector<32x64xbf16>
    %cst_59 = arith.constant dense<0.000000e+00> : vector<8x64xf32>
    %112 = tpu.matmul %109, %111, %cst_59 {dimension_numbers = #tpu.dot_dimension_numbers<[1], [0], [0], [1], [0, 0, 1, 1], [], []>} : vector<8x32xbf16>, vector<32x64xbf16>, vector<8x64xf32> -> vector<8x64xf32>
    %c0_60 = arith.constant 0 : index
    %c0_61 = arith.constant 0 : index
    %c0_62 = arith.constant 0 : index
    %113 = vector.load %arg13[%c0_60, %c0_61, %c0_62] : memref<1x1x64xf32, #tpu.memory_space<vmem>>, vector<1x1x64xf32>
    %114 = vector.shape_cast %113 : vector<1x1x64xf32> to vector<1x64xf32>
    %115 = vector.broadcast %114 : vector<1x64xf32> to vector<8x64xf32>
    %116 = arith.addf %112, %115 : vector<8x64xf32>
    %cst_63 = arith.constant 5.000000e-01 : f32
    %117 = vector.broadcast %cst_63 : f32 to vector<8x64xf32>
    %118 = arith.mulf %117, %116 : vector<8x64xf32>
    %cst_64 = arith.constant 0.707106769 : f32
    %119 = vector.broadcast %cst_64 : f32 to vector<8x64xf32>
    %120 = arith.mulf %116, %119 : vector<8x64xf32>
    %121 = math.erf %120 : vector<8x64xf32>
    %cst_65 = arith.constant 1.000000e+00 : f32
    %122 = vector.broadcast %cst_65 : f32 to vector<8x64xf32>
    %123 = arith.addf %122, %121 : vector<8x64xf32>
    %124 = arith.mulf %118, %123 : vector<8x64xf32>
    %125 = arith.truncf %124 : vector<8x64xf32> to vector<8x64xbf16>
    %c0_66 = arith.constant 0 : index
    %c0_67 = arith.constant 0 : index
    %c0_68 = arith.constant 0 : index
    %126 = vector.load %arg14[%c0_66, %c0_67, %c0_68] : memref<1x64x32xbf16, #tpu.memory_space<vmem>>, vector<1x64x32xbf16>
    %127 = vector.shape_cast %126 : vector<1x64x32xbf16> to vector<64x32xbf16>
    %cst_69 = arith.constant dense<0.000000e+00> : vector<8x32xf32>
    %128 = tpu.matmul %125, %127, %cst_69 {dimension_numbers = #tpu.dot_dimension_numbers<[1], [0], [0], [1], [0, 0, 1, 1], [], []>} : vector<8x64xbf16>, vector<64x32xbf16>, vector<8x32xf32> -> vector<8x32xf32>
    %129 = arith.addf %82, %128 : vector<8x32xf32>
    %c0_70 = arith.constant 0 : index
    %c0_71 = arith.constant 0 : index
    %c0_72 = arith.constant 0 : index
    %130 = vector.load %arg15[%c0_70, %c0_71, %c0_72] : memref<1x1x32xf32, #tpu.memory_space<vmem>>, vector<1x1x32xf32>
    %131 = vector.shape_cast %130 : vector<1x1x32xf32> to vector<1x32xf32>
    %132 = vector.broadcast %131 : vector<1x32xf32> to vector<8x32xf32>
    %133 = arith.addf %129, %132 : vector<8x32xf32>
    %c0_73 = arith.constant 0 : index
    %c0_74 = arith.constant 0 : index
    %134 = vector.load %arg17[%c0_73, %c0_74] : memref<8x32xf32, #tpu.memory_space<vmem>>, vector<8x32xf32>
    tpu.vector_store %arg17[%c0_73, %c0_74], %133 {strides = array<i32>} : memref<8x32xf32, #tpu.memory_space<vmem>>, vector<8x32xf32>,
    %c1_i32 = arith.constant 1 : i32
    %135 = arith.cmpi eq, %arg1, %c1_i32 : i32
    %136 = arith.extui %135 : i1 to i32
    %c0_i32_75 = arith.constant 0 : i32
    %137 = arith.cmpi ne, %136, %c0_i32_75 : i32
    scf.if %137 {
      %c0_76 = arith.constant 0 : index
      %c0_77 = arith.constant 0 : index
      %138 = vector.load %arg17[%c0_76, %c0_77] : memref<8x32xf32, #tpu.memory_space<vmem>>, vector<8x32xf32>
      %c0_78 = arith.constant 0 : index
      %c0_79 = arith.constant 0 : index
      %c0_80 = arith.constant 0 : index
      %139 = vector.load %arg16[%c0_78, %c0_79, %c0_80] : memref<1x8x32xf32, #tpu.memory_space<vmem>>, vector<1x8x32xf32>
      %140 = vector.shape_cast %139 : vector<1x8x32xf32> to vector<8x32xf32>
      %141 = vector.shape_cast %138 : vector<8x32xf32> to vector<1x8x32xf32>
      tpu.vector_store %arg16[%c0_78, %c0_79, %c0_80], %141 {strides = array<i32>} : memref<1x8x32xf32, #tpu.memory_space<vmem>>, vector<1x8x32xf32>,
    } else {
    }
    return
  }
  func.func @transform_0(%arg0: i32, %arg1: i32) -> (i32, i32, i32) {
    %c0_i32 = arith.constant 0 : i32
    %c0_i32_0 = arith.constant 0 : i32
    %c0_i32_1 = arith.constant 0 : i32
    return %arg0, %c0_i32, %c0_i32_0 : i32, i32, i32
  }
  func.func @transform_1(%arg0: i32, %arg1: i32) -> (i32, i32, i32) {
    %c0_i32 = arith.constant 0 : i32
    %c0_i32_0 = arith.constant 0 : i32
    %c0_i32_1 = arith.constant 0 : i32
    return %arg1, %c0_i32, %c0_i32_0 : i32, i32, i32
  }
  func.func @transform_2(%arg0: i32, %arg1: i32) -> (i32, i32, i32) {
    %c0_i32 = arith.constant 0 : i32
    %c0_i32_0 = arith.constant 0 : i32
    %c0_i32_1 = arith.constant 0 : i32
    return %arg1, %c0_i32, %c0_i32_0 : i32, i32, i32
  }
  func.func @transform_3(%arg0: i32, %arg1: i32) -> (i32, i32, i32, i32) {
    %c0_i32 = arith.constant 0 : i32
    %c0_i32_0 = arith.constant 0 : i32
    %c0_i32_1 = arith.constant 0 : i32
    %c0_i32_2 = arith.constant 0 : i32
    return %arg1, %c0_i32, %c0_i32_0, %c0_i32_1 : i32, i32, i32, i32
  }
  func.func @transform_4(%arg0: i32, %arg1: i32) -> (i32, i32, i32, i32) {
    %c0_i32 = arith.constant 0 : i32
    %c0_i32_0 = arith.constant 0 : i32
    %c0_i32_1 = arith.constant 0 : i32
    %c0_i32_2 = arith.constant 0 : i32
    return %arg1, %c0_i32, %c0_i32_0, %c0_i32_1 : i32, i32, i32, i32
  }
  func.func @transform_5(%arg0: i32, %arg1: i32) -> (i32, i32, i32, i32) {
    %c0_i32 = arith.constant 0 : i32
    %c0_i32_0 = arith.constant 0 : i32
    %c0_i32_1 = arith.constant 0 : i32
    %c0_i32_2 = arith.constant 0 : i32
    return %arg1, %c0_i32, %c0_i32_0, %c0_i32_1 : i32, i32, i32, i32
  }
  func.func @transform_6(%arg0: i32, %arg1: i32) -> (i32, i32, i32) {
    %c0_i32 = arith.constant 0 : i32
    %c0_i32_0 = arith.constant 0 : i32
    %c0_i32_1 = arith.constant 0 : i32
    return %arg1, %c0_i32, %c0_i32_0 : i32, i32, i32
  }
  func.func @transform_7(%arg0: i32, %arg1: i32) -> (i32, i32, i32) {
    %c0_i32 = arith.constant 0 : i32
    %c0_i32_0 = arith.constant 0 : i32
    %c0_i32_1 = arith.constant 0 : i32
    return %arg1, %c0_i32, %c0_i32_0 : i32, i32, i32
  }
  func.func @transform_8(%arg0: i32, %arg1: i32) -> (i32, i32, i32) {
    %c0_i32 = arith.constant 0 : i32
    %c0_i32_0 = arith.constant 0 : i32
    %c0_i32_1 = arith.constant 0 : i32
    return %arg1, %c0_i32, %c0_i32_0 : i32, i32, i32
  }
  func.func @transform_9(%arg0: i32, %arg1: i32) -> (i32, i32, i32) {
    %c0_i32 = arith.constant 0 : i32
    %c0_i32_0 = arith.constant 0 : i32
    %c0_i32_1 = arith.constant 0 : i32
    return %arg1, %c0_i32, %c0_i32_0 : i32, i32, i32
  }
  func.func @transform_10(%arg0: i32, %arg1: i32) -> (i32, i32, i32) {
    %c0_i32 = arith.constant 0 : i32
    %c0_i32_0 = arith.constant 0 : i32
    %c0_i32_1 = arith.constant 0 : i32
    return %arg1, %c0_i32, %c0_i32_0 : i32, i32, i32
  }
  func.func @transform_11(%arg0: i32, %arg1: i32) -> (i32, i32, i32) {
    %c0_i32 = arith.constant 0 : i32
    %c0_i32_0 = arith.constant 0 : i32
    %c0_i32_1 = arith.constant 0 : i32
    return %arg1, %c0_i32, %c0_i32_0 : i32, i32, i32
  }
  func.func @transform_12(%arg0: i32, %arg1: i32) -> (i32, i32, i32) {
    %c0_i32 = arith.constant 0 : i32
    %c0_i32_0 = arith.constant 0 : i32
    %c0_i32_1 = arith.constant 0 : i32
    return %arg1, %c0_i32, %c0_i32_0 : i32, i32, i32
  }
  func.func @transform_13(%arg0: i32, %arg1: i32) -> (i32, i32, i32) {
    %c0_i32 = arith.constant 0 : i32
    %c0_i32_0 = arith.constant 0 : i32
    %c0_i32_1 = arith.constant 0 : i32
    return %arg1, %c0_i32, %c0_i32_0 : i32, i32, i32
  }
  func.func @transform_14(%arg0: i32, %arg1: i32) -> (i32, i32, i32) {
    %c0_i32 = arith.constant 0 : i32
    %c0_i32_0 = arith.constant 0 : i32
    %c0_i32_1 = arith.constant 0 : i32
    return %arg0, %c0_i32, %c0_i32_0 : i32, i32, i32
  }
}

</mosaic_0001>

<llo_original>
// kernel: tpu_custom_call.1
$region0: #{tpu_custom_call.1}
  #allocation0 [shape = 'u32[]', space=smem, size = 0x4, offset = 0x4, fixed_abs, tag = 'smem constant byte address 0x4 - core index']
  #allocation1 [shape = 'u32[144,128]{1,0:T(1,128)}', space=vmem, size = 0x12000, scoped, tag = 'internal scratch']
  #allocation2 [shape = 'f32[8,32]{1,0:T(8,128)}', space=vmem, size = 0x1000, scoped, tag = 'scratch operand']
  #allocation3 [shape = 'bf16[8,64]{1,0:T(8,128)(2,1)}', space=vmem, size = 0x800, scoped, tag = 'scratch operand']
  %s0 = inlined_call_operand.vmem [shape: f32[2,8,32], index: 0, kind: input, shape index: {}]
  %s1 = inlined_call_operand.vmem [shape: f32[2,1,32], index: 1, kind: input, shape index: {}]
  %s2 = inlined_call_operand.vmem [shape: f32[2,1,32], index: 2, kind: input, shape index: {}]
  %s3 = inlined_call_operand.vmem [shape: bf16[2,4,32,16], index: 3, kind: input, shape index: {}]
  %s4 = inlined_call_operand.vmem [shape: bf16[2,4,32,16], index: 4, kind: input, shape index: {}]
  %s5 = inlined_call_operand.vmem [shape: bf16[2,4,32,16], index: 5, kind: input, shape index: {}]
  %s6 = inlined_call_operand.vmem [shape: bf16[2,64,32], index: 6, kind: input, shape index: {}]
  %s7 = inlined_call_operand.vmem [shape: f32[2,1,32], index: 7, kind: input, shape index: {}]
  %s8 = inlined_call_operand.vmem [shape: f32[2,1,32], index: 8, kind: input, shape index: {}]
  %s9 = inlined_call_operand.vmem [shape: f32[2,1,32], index: 9, kind: input, shape index: {}]
  %s10 = inlined_call_operand.vmem [shape: bf16[2,32,64], index: 10, kind: input, shape index: {}]
  %s11 = inlined_call_operand.vmem [shape: f32[2,1,64], index: 11, kind: input, shape index: {}]
  %s12 = inlined_call_operand.vmem [shape: bf16[2,64,32], index: 12, kind: input, shape index: {}]
  %s13 = inlined_call_operand.vmem [shape: f32[2,1,32], index: 13, kind: input, shape index: {}]
  %s14 = inlined_call_operand.hbm [shape: f32[2,8,32], index: 14, kind: output, shape index: {}]
  %s15 = sld [smem:[#allocation0]]
  $region97: #{tpu_custom_call.1} parent=0
    _
  %s17 = ssub.s32 1, %s15
  %s18 = scalar_select 0, %s17, %s15
  $region1: #{tpu_custom_call.1} parent=0
    #allocation4 [shape = 'u8[8192]{0}', space=vmem, size = 0x2000, scoped, tag = 'output window, operand 0']
    #allocation5 [shape = 's32[2]{0}', space=sflag, size = 0x8, scoped, tag = 'scoped memory for tpu_custom_call.1']
    %19 = vsyncpa [#allocation5], 0
    %s20 = scalar_lea.sflag [#allocation5], 1
    %21 = vsyncpa %s20, 0
    loop: start=0, step=1, limit=6
    $region2: #{tpu_custom_call.1} parent=1 // loop_pre_header
      _
    $region3: #{tpu_custom_call.1} parent=1 // loop_header
      %s23 = sphi 0, %s27
      %p24 = scmp.ge.s32.totalorder %s23, 6
      %s30 = sphi 0, %s42
      %s31 = sphi 0, %s38
      %s32 = sphi 0, %s30
      %s33 = sphi 0, %s31
      %s34 = sphi 0, %s32
      %s35 = sphi 0, %s33
      %s45 = sphi 0, %s47
      %s48 = sphi 0, %s45
      %s49 = sphi 0, %s48
      %s65 = sphi 0, %s49
      %s71 = sphi 0, %s73
      %s74 = sphi 0, %s71
      %s75 = sphi 0, %s74
      %s91 = sphi 0, %s75
      %s97 = sphi 0, %s99
      %s100 = sphi 0, %s97
      %s101 = sphi 0, %s100
      %s117 = sphi 0, %s101
      %s123 = sphi 0, %s125
      %s126 = sphi 0, %s123
      %s127 = sphi 0, %s126
      %s143 = sphi 0, %s127
      %s149 = sphi 0, %s151
      %s152 = sphi 0, %s149
      %s153 = sphi 0, %s152
      %s169 = sphi 0, %s153
      %s175 = sphi 0, %s177
      %s178 = sphi 0, %s175
      %s179 = sphi 0, %s178
      %s195 = sphi 0, %s179
      %s201 = sphi 0, %s203
      %s204 = sphi 0, %s201
      %s205 = sphi 0, %s204
      %s221 = sphi 0, %s205
      %s227 = sphi 0, %s229
      %s230 = sphi 0, %s227
      %s231 = sphi 0, %s230
      %s247 = sphi 0, %s231
      %s253 = sphi 0, %s255
      %s256 = sphi 0, %s253
      %s257 = sphi 0, %s256
      %s273 = sphi 0, %s257
      %s279 = sphi 0, %s281
      %s282 = sphi 0, %s279
      %s283 = sphi 0, %s282
      %s299 = sphi 0, %s283
      %s305 = sphi 0, %s307
      %s308 = sphi 0, %s305
      %s309 = sphi 0, %s308
      %s325 = sphi 0, %s309
      %s331 = sphi 0, %s333
      %s334 = sphi 0, %s331
      %s335 = sphi 0, %s334
      %s351 = sphi 0, %s335
      %s357 = sphi 0, %s359
      %s360 = sphi 0, %s357
      %s361 = sphi 0, %s360
      %s377 = sphi 0, %s361
      %s383 = sphi 0, %s385
      %s386 = sphi 0, %s383
      %s387 = sphi 0, %s386
      %s403 = sphi 0, %s387
      %s409 = sphi 0, %s411
      %s412 = sphi 0, %s409
      %s413 = sphi 0, %s412
      %s429 = sphi 0, %s413
    $region4: #{tpu_custom_call.1} parent=1 // loop_header_branch
      %26 = sbr.rel (%p24) target = $region8
    $region5: #{tpu_custom_call.1} parent=1 // loop_body
      %s28 = ssub.s32 %s23, 1
      %s29 = ssub.s32 %s23, 2
      %s36 = sadd.s32 1, %s31
      %p37 = scmp.ge.s32.totalorder %s36, 2
      %s38 = scalar_select %p37, 0, %s36
      %s39 = sadd.s32 1, %s30
      %s40 = scalar_select %p37, %s39, %s30
      %p41 = scmp.ge.s32.totalorder %s40, 2
      %s42 = scalar_select %p41, 0, %s40
      %s43 = ssub.s32 %s30, %s42
      %p44 = scmp.eq.s32.totalorder %s43, 0
      %s46 = sadd.s32 %s45, 1
      %s47 = scalar_select %p44, %s45, %s46
      %p50 = pneg %p44
      %p51 = scmp.eq.s32.totalorder %s23, 3
      %p52 = por %p50, %p51
      %p53 = scmp.ne.s32.totalorder %s45, %s48
      %p54 = scmp.eq.s32.totalorder %s23, 0
      %p55 = por %p53, %p54
      %p56 = scmp.ne.s32.totalorder %s45, %s48
      %p57 = scmp.eq.s32.totalorder %s28, 3
      %p58 = por %p56, %p57
      %p59 = scmp.ne.s32.totalorder %s48, %s49
      %p60 = scmp.eq.s32.totalorder %s28, 0
      %p61 = por %p59, %p60
      %p62 = scmp.ne.s32.totalorder %s48, %s49
      %p63 = scmp.eq.s32.totalorder %s29, 3
      %p64 = por %p62, %p63
      %p66 = scmp.ne.s32.totalorder %s49, %s65
      %p67 = scmp.eq.s32.totalorder %s29, 0
      %p68 = por %p66, %p67
      %s69 = ssub.s32 %s31, %s38
      %p70 = scmp.eq.s32.totalorder %s69, 0
      %s72 = sadd.s32 %s71, 1
      %s73 = scalar_select %p70, %s71, %s72
      %p76 = pneg %p70
      %p77 = scmp.eq.s32.totalorder %s23, 3
      %p78 = por %p76, %p77
      %p79 = scmp.ne.s32.totalorder %s71, %s74
      %p80 = scmp.eq.s32.totalorder %s23, 0
      %p81 = por %p79, %p80
      %p82 = scmp.ne.s32.totalorder %s71, %s74
      %p83 = scmp.eq.s32.totalorder %s28, 3
      %p84 = por %p82, %p83
      %p85 = scmp.ne.s32.totalorder %s74, %s75
      %p86 = scmp.eq.s32.totalorder %s28, 0
      %p87 = por %p85, %p86
      %p88 = scmp.ne.s32.totalorder %s74, %s75
      %p89 = scmp.eq.s32.totalorder %s29, 3
      %p90 = por %p88, %p89
      %p92 = scmp.ne.s32.totalorder %s75, %s91
      %p93 = scmp.eq.s32.totalorder %s29, 0
      %p94 = por %p92, %p93
      %s95 = ssub.s32 %s31, %s38
      %p96 = scmp.eq.s32.totalorder %s95, 0
      %s98 = sadd.s32 %s97, 1
      %s99 = scalar_select %p96, %s97, %s98
      %p102 = pneg %p96
      %p103 = scmp.eq.s32.totalorder %s23, 3
      %p104 = por %p102, %p103
      %p105 = scmp.ne.s32.totalorder %s97, %s100
      %p106 = scmp.eq.s32.totalorder %s23, 0
      %p107 = por %p105, %p106
      %p108 = scmp.ne.s32.totalorder %s97, %s100
      %p109 = scmp.eq.s32.totalorder %s28, 3
      %p110 = por %p108, %p109
      %p111 = scmp.ne.s32.totalorder %s100, %s101
      %p112 = scmp.eq.s32.totalorder %s28, 0
      %p113 = por %p111, %p112
      %p114 = scmp.ne.s32.totalorder %s100, %s101
      %p115 = scmp.eq.s32.totalorder %s29, 3
      %p116 = por %p114, %p115
      %p118 = scmp.ne.s32.totalorder %s101, %s117
      %p119 = scmp.eq.s32.totalorder %s29, 0
      %p120 = por %p118, %p119
      %s121 = ssub.s32 %s31, %s38
      %p122 = scmp.eq.s32.totalorder %s121, 0
      %s124 = sadd.s32 %s123, 1
      %s125 = scalar_select %p122, %s123, %s124
      %p128 = pneg %p122
      %p129 = scmp.eq.s32.totalorder %s23, 3
      %p130 = por %p128, %p129
      %p131 = scmp.ne.s32.totalorder %s123, %s126
      %p132 = scmp.eq.s32.totalorder %s23, 0
      %p133 = por %p131, %p132
      %p134 = scmp.ne.s32.totalorder %s123, %s126
      %p135 = scmp.eq.s32.totalorder %s28, 3
      %p136 = por %p134, %p135
      %p137 = scmp.ne.s32.totalorder %s126, %s127
      %p138 = scmp.eq.s32.totalorder %s28, 0
      %p139 = por %p137, %p138
      %p140 = scmp.ne.s32.totalorder %s126, %s127
      %p141 = scmp.eq.s32.totalorder %s29, 3
      %p142 = por %p140, %p141
      %p144 = scmp.ne.s32.totalorder %s127, %s143
      %p145 = scmp.eq.s32.totalorder %s29, 0
      %p146 = por %p144, %p145
      %s147 = ssub.s32 %s31, %s38
      %p148 = scmp.eq.s32.totalorder %s147, 0
      %s150 = sadd.s32 %s149, 1
      %s151 = scalar_select %p148, %s149, %s150
      %p154 = pneg %p148
      %p155 = scmp.eq.s32.totalorder %s23, 3
      %p156 = por %p154, %p155
      %p157 = scmp.ne.s32.totalorder %s149, %s152
      %p158 = scmp.eq.s32.totalorder %s23, 0
      %p159 = por %p157, %p158
      %p160 = scmp.ne.s32.totalorder %s149, %s152
      %p161 = scmp.eq.s32.totalorder %s28, 3
      %p162 = por %p160, %p161
      %p163 = scmp.ne.s32.totalorder %s152, %s153
      %p164 = scmp.eq.s32.totalorder %s28, 0
      %p165 = por %p163, %p164
      %p166 = scmp.ne.s32.totalorder %s152, %s153
      %p167 = scmp.eq.s32.totalorder %s29, 3
      %p168 = por %p166, %p167
      %p170 = scmp.ne.s32.totalorder %s153, %s169
      %p171 = scmp.eq.s32.totalorder %s29, 0
      %p172 = por %p170, %p171
      %s173 = ssub.s32 %s31, %s38
      %p174 = scmp.eq.s32.totalorder %s173, 0
      %s176 = sadd.s32 %s175, 1
      %s177 = scalar_select %p174, %s175, %s176
      %p180 = pneg %p174
      %p181 = scmp.eq.s32.totalorder %s23, 3
      %p182 = por %p180, %p181
      %p183 = scmp.ne.s32.totalorder %s175, %s178
      %p184 = scmp.eq.s32.totalorder %s23, 0
      %p185 = por %p183, %p184
      %p186 = scmp.ne.s32.totalorder %s175, %s178
      %p187 = scmp.eq.s32.totalorder %s28, 3
      %p188 = por %p186, %p187
      %p189 = scmp.ne.s32.totalorder %s178, %s179
      %p190 = scmp.eq.s32.totalorder %s28, 0
      %p191 = por %p189, %p190
      %p192 = scmp.ne.s32.totalorder %s178, %s179
      %p193 = scmp.eq.s32.totalorder %s29, 3
      %p194 = por %p192, %p193
      %p196 = scmp.ne.s32.totalorder %s179, %s195
      %p197 = scmp.eq.s32.totalorder %s29, 0
      %p198 = por %p196, %p197
      %s199 = ssub.s32 %s31, %s38
      %p200 = scmp.eq.s32.totalorder %s199, 0
      %s202 = sadd.s32 %s201, 1
      %s203 = scalar_select %p200, %s201, %s202
      %p206 = pneg %p200
      %p207 = scmp.eq.s32.totalorder %s23, 3
      %p208 = por %p206, %p207
      %p209 = scmp.ne.s32.totalorder %s201, %s204
      %p210 = scmp.eq.s32.totalorder %s23, 0
      %p211 = por %p209, %p210
      %p212 = scmp.ne.s32.totalorder %s201, %s204
      %p213 = scmp.eq.s32.totalorder %s28, 3
      %p214 = por %p212, %p213
      %p215 = scmp.ne.s32.totalorder %s204, %s205
      %p216 = scmp.eq.s32.totalorder %s28, 0
      %p217 = por %p215, %p216
      %p218 = scmp.ne.s32.totalorder %s204, %s205
      %p219 = scmp.eq.s32.totalorder %s29, 3
      %p220 = por %p218, %p219
      %p222 = scmp.ne.s32.totalorder %s205, %s221
      %p223 = scmp.eq.s32.totalorder %s29, 0
      %p224 = por %p222, %p223
      %s225 = ssub.s32 %s31, %s38
      %p226 = scmp.eq.s32.totalorder %s225, 0
      %s228 = sadd.s32 %s227, 1
      %s229 = scalar_select %p226, %s227, %s228
      %p232 = pneg %p226
      %p233 = scmp.eq.s32.totalorder %s23, 3
      %p234 = por %p232, %p233
      %p235 = scmp.ne.s32.totalorder %s227, %s230
      %p236 = scmp.eq.s32.totalorder %s23, 0
      %p237 = por %p235, %p236
      %p238 = scmp.ne.s32.totalorder %s227, %s230
      %p239 = scmp.eq.s32.totalorder %s28, 3
      %p240 = por %p238, %p239
      %p241 = scmp.ne.s32.totalorder %s230, %s231
      %p242 = scmp.eq.s32.totalorder %s28, 0
      %p243 = por %p241, %p242
      %p244 = scmp.ne.s32.totalorder %s230, %s231
      %p245 = scmp.eq.s32.totalorder %s29, 3
      %p246 = por %p244, %p245
      %p248 = scmp.ne.s32.totalorder %s231, %s247
      %p249 = scmp.eq.s32.totalorder %s29, 0
      %p250 = por %p248, %p249
      %s251 = ssub.s32 %s31, %s38
      %p252 = scmp.eq.s32.totalorder %s251, 0
      %s254 = sadd.s32 %s253, 1
      %s255 = scalar_select %p252, %s253, %s254
      %p258 = pneg %p252
      %p259 = scmp.eq.s32.totalorder %s23, 3
      %p260 = por %p258, %p259
      %p261 = scmp.ne.s32.totalorder %s253, %s256
      %p262 = scmp.eq.s32.totalorder %s23, 0
      %p263 = por %p261, %p262
      %p264 = scmp.ne.s32.totalorder %s253, %s256
      %p265 = scmp.eq.s32.totalorder %s28, 3
      %p266 = por %p264, %p265
      %p267 = scmp.ne.s32.totalorder %s256, %s257
      %p268 = scmp.eq.s32.totalorder %s28, 0
      %p269 = por %p267, %p268
      %p270 = scmp.ne.s32.totalorder %s256, %s257
      %p271 = scmp.eq.s32.totalorder %s29, 3
      %p272 = por %p270, %p271
      %p274 = scmp.ne.s32.totalorder %s257, %s273
      %p275 = scmp.eq.s32.totalorder %s29, 0
      %p276 = por %p274, %p275
      %s277 = ssub.s32 %s31, %s38
      %p278 = scmp.eq.s32.totalorder %s277, 0
      %s280 = sadd.s32 %s279, 1
      %s281 = scalar_select %p278, %s279, %s280
      %p284 = pneg %p278
      %p285 = scmp.eq.s32.totalorder %s23, 3
      %p286 = por %p284, %p285
      %p287 = scmp.ne.s32.totalorder %s279, %s282
      %p288 = scmp.eq.s32.totalorder %s23, 0
      %p289 = por %p287, %p288
      %p290 = scmp.ne.s32.totalorder %s279, %s282
      %p291 = scmp.eq.s32.totalorder %s28, 3
      %p292 = por %p290, %p291
      %p293 = scmp.ne.s32.totalorder %s282, %s283
      %p294 = scmp.eq.s32.totalorder %s28, 0
      %p295 = por %p293, %p294
      %p296 = scmp.ne.s32.totalorder %s282, %s283
      %p297 = scmp.eq.s32.totalorder %s29, 3
      %p298 = por %p296, %p297
      %p300 = scmp.ne.s32.totalorder %s283, %s299
      %p301 = scmp.eq.s32.totalorder %s29, 0
      %p302 = por %p300, %p301
      %s303 = ssub.s32 %s31, %s38
      %p304 = scmp.eq.s32.totalorder %s303, 0
      %s306 = sadd.s32 %s305, 1
      %s307 = scalar_select %p304, %s305, %s306
      %p310 = pneg %p304
      %p311 = scmp.eq.s32.totalorder %s23, 3
      %p312 = por %p310, %p311
      %p313 = scmp.ne.s32.totalorder %s305, %s308
      %p314 = scmp.eq.s32.totalorder %s23, 0
      %p315 = por %p313, %p314
      %p316 = scmp.ne.s32.totalorder %s305, %s308
      %p317 = scmp.eq.s32.totalorder %s28, 3
      %p318 = por %p316, %p317
      %p319 = scmp.ne.s32.totalorder %s308, %s309
      %p320 = scmp.eq.s32.totalorder %s28, 0
      %p321 = por %p319, %p320
      %p322 = scmp.ne.s32.totalorder %s308, %s309
      %p323 = scmp.eq.s32.totalorder %s29, 3
      %p324 = por %p322, %p323
      %p326 = scmp.ne.s32.totalorder %s309, %s325
      %p327 = scmp.eq.s32.totalorder %s29, 0
      %p328 = por %p326, %p327
      %s329 = ssub.s32 %s31, %s38
      %p330 = scmp.eq.s32.totalorder %s329, 0
      %s332 = sadd.s32 %s331, 1
      %s333 = scalar_select %p330, %s331, %s332
      %p336 = pneg %p330
      %p337 = scmp.eq.s32.totalorder %s23, 3
      %p338 = por %p336, %p337
      %p339 = scmp.ne.s32.totalorder %s331, %s334
      %p340 = scmp.eq.s32.totalorder %s23, 0
      %p341 = por %p339, %p340
      %p342 = scmp.ne.s32.totalorder %s331, %s334
      %p343 = scmp.eq.s32.totalorder %s28, 3
      %p344 = por %p342, %p343
      %p345 = scmp.ne.s32.totalorder %s334, %s335
      %p346 = scmp.eq.s32.totalorder %s28, 0
      %p347 = por %p345, %p346
      %p348 = scmp.ne.s32.totalorder %s334, %s335
      %p349 = scmp.eq.s32.totalorder %s29, 3
      %p350 = por %p348, %p349
      %p352 = scmp.ne.s32.totalorder %s335, %s351
      %p353 = scmp.eq.s32.totalorder %s29, 0
      %p354 = por %p352, %p353
      %s355 = ssub.s32 %s31, %s38
      %p356 = scmp.eq.s32.totalorder %s355, 0
      %s358 = sadd.s32 %s357, 1
      %s359 = scalar_select %p356, %s357, %s358
      %p362 = pneg %p356
      %p363 = scmp.eq.s32.totalorder %s23, 3
      %p364 = por %p362, %p363
      %p365 = scmp.ne.s32.totalorder %s357, %s360
      %p366 = scmp.eq.s32.totalorder %s23, 0
      %p367 = por %p365, %p366
      %p368 = scmp.ne.s32.totalorder %s357, %s360
      %p369 = scmp.eq.s32.totalorder %s28, 3
      %p370 = por %p368, %p369
      %p371 = scmp.ne.s32.totalorder %s360, %s361
      %p372 = scmp.eq.s32.totalorder %s28, 0
      %p373 = por %p371, %p372
      %p374 = scmp.ne.s32.totalorder %s360, %s361
      %p375 = scmp.eq.s32.totalorder %s29, 3
      %p376 = por %p374, %p375
      %p378 = scmp.ne.s32.totalorder %s361, %s377
      %p379 = scmp.eq.s32.totalorder %s29, 0
      %p380 = por %p378, %p379
      %s381 = ssub.s32 %s31, %s38
      %p382 = scmp.eq.s32.totalorder %s381, 0
      %s384 = sadd.s32 %s383, 1
      %s385 = scalar_select %p382, %s383, %s384
      %p388 = pneg %p382
      %p389 = scmp.eq.s32.totalorder %s23, 3
      %p390 = por %p388, %p389
      %p391 = scmp.ne.s32.totalorder %s383, %s386
      %p392 = scmp.eq.s32.totalorder %s23, 0
      %p393 = por %p391, %p392
      %p394 = scmp.ne.s32.totalorder %s383, %s386
      %p395 = scmp.eq.s32.totalorder %s28, 3
      %p396 = por %p394, %p395
      %p397 = scmp.ne.s32.totalorder %s386, %s387
      %p398 = scmp.eq.s32.totalorder %s28, 0
      %p399 = por %p397, %p398
      %p400 = scmp.ne.s32.totalorder %s386, %s387
      %p401 = scmp.eq.s32.totalorder %s29, 3
      %p402 = por %p400, %p401
      %p404 = scmp.ne.s32.totalorder %s387, %s403
      %p405 = scmp.eq.s32.totalorder %s29, 0
      %p406 = por %p404, %p405
      %s407 = ssub.s32 %s30, %s42
      %p408 = scmp.eq.s32.totalorder %s407, 0
      %s410 = sadd.s32 %s409, 1
      %s411 = scalar_select %p408, %s409, %s410
      %p414 = pneg %p408
      %p415 = scmp.eq.s32.totalorder %s23, 3
      %p416 = por %p414, %p415
      %p417 = scmp.ne.s32.totalorder %s409, %s412
      %p418 = scmp.eq.s32.totalorder %s23, 0
      %p419 = por %p417, %p418
      %p420 = scmp.ne.s32.totalorder %s409, %s412
      %p421 = scmp.eq.s32.totalorder %s28, 3
      %p422 = por %p420, %p421
      %p423 = scmp.ne.s32.totalorder %s412, %s413
      %p424 = scmp.eq.s32.totalorder %s28, 0
      %p425 = por %p423, %p424
      %p426 = scmp.ne.s32.totalorder %s412, %s413
      %p427 = scmp.eq.s32.totalorder %s29, 3
      %p428 = por %p426, %p427
      %p430 = scmp.ne.s32.totalorder %s413, %s429
      %p431 = scmp.eq.s32.totalorder %s29, 0
      %p432 = por %p430, %p431
      %p433 = scmp.le.s32.totalorder 1, %s23
      %p434 = scmp.lt.s32.totalorder %s23, 5
      %p435 = pnand %p433, %p434
      %p436 = pneg %p435
      // Predicated region
      $region9: #{tpu_custom_call.1} parent=5 // pred_check
        _
      $region10: #{tpu_custom_call.1} parent=5 // pred_check_branch
        %438 = sbr.rel (%p435) target = $region12
      $region11: #{tpu_custom_call.1} parent=5 // pred_region
        %s439 = ssub.s32 %s23, 1
      $region12: #{tpu_custom_call.1} parent=5 // pred_fallthru
        _
      %p440 = scmp.lt.s32.totalorder %s23, 4
      // Predicated region
      $region13: #{tpu_custom_call.1} parent=5 // pred_check
        %p441 = pneg %p440
      $region14: #{tpu_custom_call.1} parent=5 // pred_check_branch
        %443 = sbr.rel (%p441) target = $region16
      $region15: #{tpu_custom_call.1} parent=5 // pred_region
        // Predicated region
        $region17: #{tpu_custom_call.1} parent=15 // pred_check
          %p444 = pneg %p55
        $region18: #{tpu_custom_call.1} parent=15 // pred_check_branch
          %446 = sbr.rel (%p444) target = $region20
        $region19: #{tpu_custom_call.1} parent=15 // pred_region
          %p447 = scmp.lt.s32.totalorder %s30, 1
          %s448 = scalar_select %p447, %s30, 1
          %s449 = smul.addr %s448, 8
          %s450 = scalar_lea.vmem %s0, %s449
        $region20: #{tpu_custom_call.1} parent=15 // pred_fallthru
          _
        // Predicated region
        $region21: #{tpu_custom_call.1} parent=15 // pred_check
          %p451 = pneg %p81
        $region22: #{tpu_custom_call.1} parent=15 // pred_check_branch
          %453 = sbr.rel (%p451) target = $region24
        $region23: #{tpu_custom_call.1} parent=15 // pred_region
          %p454 = scmp.lt.s32.totalorder %s31, 1
          %s455 = scalar_select %p454, %s31, 1
          %s456 = scalar_lea.vmem %s1, %s455
        $region24: #{tpu_custom_call.1} parent=15 // pred_fallthru
          _
        // Predicated region
        $region25: #{tpu_custom_call.1} parent=15 // pred_check
          %p457 = pneg %p107
        $region26: #{tpu_custom_call.1} parent=15 // pred_check_branch
          %459 = sbr.rel (%p457) target = $region28
        $region27: #{tpu_custom_call.1} parent=15 // pred_region
          %p460 = scmp.lt.s32.totalorder %s31, 1
          %s461 = scalar_select %p460, %s31, 1
          %s462 = scalar_lea.vmem %s2, %s461
        $region28: #{tpu_custom_call.1} parent=15 // pred_fallthru
          _
        // Predicated region
        $region29: #{tpu_custom_call.1} parent=15 // pred_check
          %p463 = pneg %p133
        $region30: #{tpu_custom_call.1} parent=15 // pred_check_branch
          %465 = sbr.rel (%p463) target = $region32
        $region31: #{tpu_custom_call.1} parent=15 // pred_region
          %p466 = scmp.lt.s32.totalorder %s31, 1
          %s467 = scalar_select %p466, %s31, 1
          %s468 = smul.addr %s467, 16
          %s469 = smul.addr %s468, 4
          %s470 = scalar_lea.vmem %s3, %s469
        $region32: #{tpu_custom_call.1} parent=15 // pred_fallthru
          _
        // Predicated region
        $region33: #{tpu_custom_call.1} parent=15 // pred_check
          %p471 = pneg %p159
        $region34: #{tpu_custom_call.1} parent=15 // pred_check_branch
          %473 = sbr.rel (%p471) target = $region36
        $region35: #{tpu_custom_call.1} parent=15 // pred_region
          %p474 = scmp.lt.s32.totalorder %s31, 1
          %s475 = scalar_select %p474, %s31, 1
          %s476 = smul.addr %s475, 16
          %s477 = smul.addr %s476, 4
          %s478 = scalar_lea.vmem %s4, %s477
        $region36: #{tpu_custom_call.1} parent=15 // pred_fallthru
          _
        // Predicated region
        $region37: #{tpu_custom_call.1} parent=15 // pred_check
          %p479 = pneg %p185
        $region38: #{tpu_custom_call.1} parent=15 // pred_check_branch
          %481 = sbr.rel (%p479) target = $region40
        $region39: #{tpu_custom_call.1} parent=15 // pred_region
          %p482 = scmp.lt.s32.totalorder %s31, 1
          %s483 = scalar_select %p482, %s31, 1
          %s484 = smul.addr %s483, 16
          %s485 = smul.addr %s484, 4
          %s486 = scalar_lea.vmem %s5, %s485
        $region40: #{tpu_custom_call.1} parent=15 // pred_fallthru
          _
        // Predicated region
        $region41: #{tpu_custom_call.1} parent=15 // pred_check
          %p487 = pneg %p211
        $region42: #{tpu_custom_call.1} parent=15 // pred_check_branch
          %489 = sbr.rel (%p487) target = $region44
        $region43: #{tpu_custom_call.1} parent=15 // pred_region
          %p490 = scmp.lt.s32.totalorder %s31, 1
          %s491 = scalar_select %p490, %s31, 1
          %s492 = smul.addr %s491, 8
          %s493 = smul.addr %s492, 4
          %s494 = scalar_lea.vmem %s6, %s493
        $region44: #{tpu_custom_call.1} parent=15 // pred_fallthru
          _
        // Predicated region
        $region45: #{tpu_custom_call.1} parent=15 // pred_check
          %p495 = pneg %p237
        $region46: #{tpu_custom_call.1} parent=15 // pred_check_branch
          %497 = sbr.rel (%p495) target = $region48
        $region47: #{tpu_custom_call.1} parent=15 // pred_region
          %p498 = scmp.lt.s32.totalorder %s31, 1
          %s499 = scalar_select %p498, %s31, 1
          %s500 = scalar_lea.vmem %s7, %s499
        $region48: #{tpu_custom_call.1} parent=15 // pred_fallthru
          _
        // Predicated region
        $region49: #{tpu_custom_call.1} parent=15 // pred_check
          %p501 = pneg %p263
        $region50: #{tpu_custom_call.1} parent=15 // pred_check_branch
          %503 = sbr.rel (%p501) target = $region52
        $region51: #{tpu_custom_call.1} parent=15 // pred_region
          %p504 = scmp.lt.s32.totalorder %s31, 1
          %s505 = scalar_select %p504, %s31, 1
          %s506 = scalar_lea.vmem %s8, %s505
        $region52: #{tpu_custom_call.1} parent=15 // pred_fallthru
          _
        // Predicated region
        $region53: #{tpu_custom_call.1} parent=15 // pred_check
          %p507 = pneg %p289
        $region54: #{tpu_custom_call.1} parent=15 // pred_check_branch
          %509 = sbr.rel (%p507) target = $region56
        $region55: #{tpu_custom_call.1} parent=15 // pred_region
          %p510 = scmp.lt.s32.totalorder %s31, 1
          %s511 = scalar_select %p510, %s31, 1
          %s512 = scalar_lea.vmem %s9, %s511
        $region56: #{tpu_custom_call.1} parent=15 // pred_fallthru
          _
        // Predicated region
        $region57: #{tpu_custom_call.1} parent=15 // pred_check
          %p513 = pneg %p315
        $region58: #{tpu_custom_call.1} parent=15 // pred_check_branch
          %515 = sbr.rel (%p513) target = $region60
        $region59: #{tpu_custom_call.1} parent=15 // pred_region
          %p516 = scmp.lt.s32.totalorder %s31, 1
          %s517 = scalar_select %p516, %s31, 1
          %s518 = smul.addr %s517, 4
          %s519 = smul.addr %s518, 4
          %s520 = scalar_lea.vmem %s10, %s519
        $region60: #{tpu_custom_call.1} parent=15 // pred_fallthru
          _
        // Predicated region
        $region61: #{tpu_custom_call.1} parent=15 // pred_check
          %p521 = pneg %p341
        $region62: #{tpu_custom_call.1} parent=15 // pred_check_branch
          %523 = sbr.rel (%p521) target = $region64
        $region63: #{tpu_custom_call.1} parent=15 // pred_region
          %p524 = scmp.lt.s32.totalorder %s31, 1
          %s525 = scalar_select %p524, %s31, 1
          %s526 = scalar_lea.vmem %s11, %s525
        $region64: #{tpu_custom_call.1} parent=15 // pred_fallthru
          _
        // Predicated region
        $region65: #{tpu_custom_call.1} parent=15 // pred_check
          %p527 = pneg %p367
        $region66: #{tpu_custom_call.1} parent=15 // pred_check_branch
          %529 = sbr.rel (%p527) target = $region68
        $region67: #{tpu_custom_call.1} parent=15 // pred_region
          %p530 = scmp.lt.s32.totalorder %s31, 1
          %s531 = scalar_select %p530, %s31, 1
          %s532 = smul.addr %s531, 8
          %s533 = smul.addr %s532, 4
          %s534 = scalar_lea.vmem %s12, %s533
        $region68: #{tpu_custom_call.1} parent=15 // pred_fallthru
          _
        // Predicated region
        $region69: #{tpu_custom_call.1} parent=15 // pred_check
          %p535 = pneg %p393
        $region70: #{tpu_custom_call.1} parent=15 // pred_check_branch
          %537 = sbr.rel (%p535) target = $region72
        $region71: #{tpu_custom_call.1} parent=15 // pred_region
          %p538 = scmp.lt.s32.totalorder %s31, 1
          %s539 = scalar_select %p538, %s31, 1
          %s540 = scalar_lea.vmem %s13, %s539
        $region72: #{tpu_custom_call.1} parent=15 // pred_fallthru
          _
      $region16: #{tpu_custom_call.1} parent=5 // pred_fallthru
        _
      %p541 = scmp.le.s32.totalorder 1, %s23
      %p542 = scmp.lt.s32.totalorder %s23, 5
      %p543 = pnand %p541, %p542
      %p544 = pneg %p543
      // Predicated region
      $region73: #{tpu_custom_call.1} parent=5 // pred_check
        _
      $region74: #{tpu_custom_call.1} parent=5 // pred_check_branch
        %546 = sbr.rel (%p543) target = $region76
      $region75: #{tpu_custom_call.1} parent=5 // pred_region
        %s547 = ssub.s32 %s23, 1
        %p548 = scmp.lt.s32.totalorder %s32, 1
        %s549 = scalar_select %p548, %s32, 1
        %s550 = smul.addr %s549, 8
        %s551 = scalar_lea.vmem %s0, %s550
        %p552 = pneg %p61
        %p553 = pneg %p58
        %p554 = scmp.lt.s32.totalorder %s33, 1
        %s555 = scalar_select %p554, %s33, 1
        %s556 = scalar_lea.vmem %s1, %s555
        %p557 = pneg %p87
        %p558 = pneg %p84
        %p559 = scmp.lt.s32.totalorder %s33, 1
        %s560 = scalar_select %p559, %s33, 1
        %s561 = scalar_lea.vmem %s2, %s560
        %p562 = pneg %p113
        %p563 = pneg %p110
        %p564 = scmp.lt.s32.totalorder %s33, 1
        %s565 = scalar_select %p564, %s33, 1
        %s566 = smul.addr %s565, 16
        %s567 = smul.addr %s566, 4
        %s568 = scalar_lea.vmem %s3, %s567
        %p569 = pneg %p139
        %p570 = pneg %p136
        %p571 = scmp.lt.s32.totalorder %s33, 1
        %s572 = scalar_select %p571, %s33, 1
        %s573 = smul.addr %s572, 16
        %s574 = smul.addr %s573, 4
        %s575 = scalar_lea.vmem %s4, %s574
        %p576 = pneg %p165
        %p577 = pneg %p162
        %p578 = scmp.lt.s32.totalorder %s33, 1
        %s579 = scalar_select %p578, %s33, 1
        %s580 = smul.addr %s579, 16
        %s581 = smul.addr %s580, 4
        %s582 = scalar_lea.vmem %s5, %s581
        %p583 = pneg %p191
        %p584 = pneg %p188
        %p585 = scmp.lt.s32.totalorder %s33, 1
        %s586 = scalar_select %p585, %s33, 1
        %s587 = smul.addr %s586, 8
        %s588 = smul.addr %s587, 4
        %s589 = scalar_lea.vmem %s6, %s588
        %p590 = pneg %p217
        %p591 = pneg %p214
        %p592 = scmp.lt.s32.totalorder %s33, 1
        %s593 = scalar_select %p592, %s33, 1
        %s594 = scalar_lea.vmem %s7, %s593
        %p595 = pneg %p243
        %p596 = pneg %p240
        %p597 = scmp.lt.s32.totalorder %s33, 1
        %s598 = scalar_select %p597, %s33, 1
        %s599 = scalar_lea.vmem %s8, %s598
        %p600 = pneg %p269
        %p601 = pneg %p266
        %p602 = scmp.lt.s32.totalorder %s33, 1
        %s603 = scalar_select %p602, %s33, 1
        %s604 = scalar_lea.vmem %s9, %s603
        %p605 = pneg %p295
        %p606 = pneg %p292
        %p607 = scmp.lt.s32.totalorder %s33, 1
        %s608 = scalar_select %p607, %s33, 1
        %s609 = smul.addr %s608, 4
        %s610 = smul.addr %s609, 4
        %s611 = scalar_lea.vmem %s10, %s610
        %p612 = pneg %p321
        %p613 = pneg %p318
        %p614 = scmp.lt.s32.totalorder %s33, 1
        %s615 = scalar_select %p614, %s33, 1
        %s616 = scalar_lea.vmem %s11, %s615
        %p617 = pneg %p347
        %p618 = pneg %p344
        %p619 = scmp.lt.s32.totalorder %s33, 1
        %s620 = scalar_select %p619, %s33, 1
        %s621 = smul.addr %s620, 8
        %s622 = smul.addr %s621, 4
        %s623 = scalar_lea.vmem %s12, %s622
        %p624 = pneg %p373
        %p625 = pneg %p370
        %p626 = scmp.lt.s32.totalorder %s33, 1
        %s627 = scalar_select %p626, %s33, 1
        %s628 = scalar_lea.vmem %s13, %s627
        %p629 = pneg %p399
        %p630 = pneg %p396
        %p631 = pneg %p425
        %p632 = pneg %p422
        %s633 = sand.u32 %s412, 1
        %s634 = scalar_lea.sflag [#allocation5], %s633
        %s635 = sand.u32 %s412, 1
        %s636 = smul.addr %s635, 8
        %s637 = scalar_lea.vmem [#allocation4], %s636
        %p638 = scmp.lt.s32.totalorder %s32, 1
        %s639 = scalar_select %p638, %s32, 1
        %s640 = smul.addr %s639, 8
        %s641 = scalar_lea.vmem %s0, %s640
        %p642 = scmp.lt.s32.totalorder %s33, 1
        %s643 = scalar_select %p642, %s33, 1
        %s644 = scalar_lea.vmem %s1, %s643
        %p645 = scmp.lt.s32.totalorder %s33, 1
        %s646 = scalar_select %p645, %s33, 1
        %s647 = scalar_lea.vmem %s2, %s646
        %p648 = scmp.lt.s32.totalorder %s33, 1
        %s649 = scalar_select %p648, %s33, 1
        %s650 = smul.addr %s649, 16
        %s651 = smul.addr %s650, 4
        %s652 = scalar_lea.vmem %s3, %s651
        %p653 = scmp.lt.s32.totalorder %s33, 1
        %s654 = scalar_select %p653, %s33, 1
        %s655 = smul.addr %s654, 16
        %s656 = smul.addr %s655, 4
        %s657 = scalar_lea.vmem %s4, %s656
        %p658 = scmp.lt.s32.totalorder %s33, 1
        %s659 = scalar_select %p658, %s33, 1
        %s660 = smul.addr %s659, 16
        %s661 = smul.addr %s660, 4
        %s662 = scalar_lea.vmem %s5, %s661
        %p663 = scmp.lt.s32.totalorder %s33, 1
        %s664 = scalar_select %p663, %s33, 1
        %s665 = smul.addr %s664, 8
        %s666 = smul.addr %s665, 4
        %s667 = scalar_lea.vmem %s6, %s666
        %p668 = scmp.lt.s32.totalorder %s33, 1
        %s669 = scalar_select %p668, %s33, 1
        %s670 = scalar_lea.vmem %s7, %s669
        %p671 = scmp.lt.s32.totalorder %s33, 1
        %s672 = scalar_select %p671, %s33, 1
        %s673 = scalar_lea.vmem %s8, %s672
        %p674 = scmp.lt.s32.totalorder %s33, 1
        %s675 = scalar_select %p674, %s33, 1
        %s676 = scalar_lea.vmem %s9, %s675
        %p677 = scmp.lt.s32.totalorder %s33, 1
        %s678 = scalar_select %p677, %s33, 1
        %s679 = smul.addr %s678, 4
        %s680 = smul.addr %s679, 4
        %s681 = scalar_lea.vmem %s10, %s680
        %p682 = scmp.lt.s32.totalorder %s33, 1
        %s683 = scalar_select %p682, %s33, 1
        %s684 = scalar_lea.vmem %s11, %s683
        %p685 = scmp.lt.s32.totalorder %s33, 1
        %s686 = scalar_select %p685, %s33, 1
        %s687 = smul.addr %s686, 8
        %s688 = smul.addr %s687, 4
        %s689 = scalar_lea.vmem %s12, %s688
        %p690 = scmp.lt.s32.totalorder %s33, 1
        %s691 = scalar_select %p690, %s33, 1
        %s692 = scalar_lea.vmem %s13, %s691
        %p694 = scmp.eq.s32.totalorder %s33, 0
        // Predicated region
        $region77: #{tpu_custom_call.1} parent=75 // pred_check
          %p695 = pneg %p694
        $region78: #{tpu_custom_call.1} parent=75 // pred_check_branch
          %697 = sbr.rel (%p695) target = $region80
        $region79: #{tpu_custom_call.1} parent=75 // pred_region
          %v698 = vld [vmem:[%s641] sm:$0xff]
          %vm699 = vcmask 261120
          %700 = vst.msk [vmem:[#allocation2] sm:$0xff] %vm699, %v698
        $region80: #{tpu_custom_call.1} parent=75 // pred_fallthru
          _
        %v701 = vld [vmem:[#allocation2] sm:$0xff]
        %v702 = vld [vmem:[%s644] sm:$0x1]
        %v703 = vld [vmem:[%s647] sm:$0x1]
        %vm704 = vcmask 261120
        %v705 = vsel %vm704, %v701, 0.0
        %706 = vadd.xlane.f32.xlu0 %v705
        %v707 = vpop.xlane.xlu0 %706
        %v708 = vrcp.pop 32.0
        %v709 = vmul.f32 %v707, %v708
        %v710 = vsub.f32 %v701, %v709
        %v711 = vmul.f32 %v710, %v710
        %v712 = vsel %vm704, %v711, 0.0
        %713 = vadd.xlane.f32.xlu0 %v712
        %v714 = vpop.xlane.xlu0 %713
        %v715 = vmul.f32 %v714, %v708
        %v716 = vadd.f32 %v715, 1e-05
        %v717 = vrsqrt.pop %v716
        %v718 = vmul.f32 %v710, %v717
        %v720 = vlaneseq
        %v721 = vshrl.u32 %v720, 7
        %v722 = vsub.s32 0, %v721
        %v723 = vrot.slane %v702, %v722
        %v725 = vmul.f32 %v718, %v723
        %v727 = vlaneseq
        %v728 = vshrl.u32 %v727, 7
        %v729 = vsub.s32 0, %v728
        %v730 = vrot.slane %v703, %v729
        %v732 = vadd.f32 %v725, %v730
        %v733 = vpack.c.bf16 %v732, %v732
        %v734 = vld [vmem:[%s652] sm:$0xf]
        %v735 = vld [vmem:[%s652 + $0x4] sm:$0xf]
        %v736 = vld [vmem:[%s652 + $0x8] sm:$0xf]
        %v737 = vld [vmem:[%s652 + $0xc] sm:$0xf]
        %v738 = vld [vmem:[%s652 + $0x10] sm:$0xf]
        %v739 = vld [vmem:[%s652 + $0x14] sm:$0xf]
        %v740 = vld [vmem:[%s652 + $0x18] sm:$0xf]
        %v741 = vld [vmem:[%s652 + $0x1c] sm:$0xf]
        %v742 = vld [vmem:[%s652 + $0x20] sm:$0xf]
        %v743 = vld [vmem:[%s652 + $0x24] sm:$0xf]
        %v744 = vld [vmem:[%s652 + $0x28] sm:$0xf]
        %v745 = vld [vmem:[%s652 + $0x2c] sm:$0xf]
        %v746 = vld [vmem:[%s652 + $0x30] sm:$0xf]
        %v747 = vld [vmem:[%s652 + $0x34] sm:$0xf]
        %v748 = vld [vmem:[%s652 + $0x38] sm:$0xf]
        %v749 = vld [vmem:[%s652 + $0x3c] sm:$0xf]
        %v754 = vunpack.c.l.b16 %v734
        %v755 = vunpack.c.l.b16 %v735
        %v756 = vunpack.c.l.b16 %v736
        %v757 = vunpack.c.l.b16 %v737
        %v758 = vpack.c.b16 %v755, %v754
        %v759 = vpack.c.b16 %v757, %v756
        %v763 = vsel %vm704, %v733, 0
        %765 = vmatprep.subr.bf16.mxu0 0
        %766 = vmatpush1.bf16.msra.mxu0 0
        %767 = vmatprep.subr.bf16.mxu0 0
        %768 = vmatpush1.bf16.msra.mxu0 0
        %769 = vmatprep.subr.bf16.mxu0 0
        %770 = vmatpush1.bf16.msra.mxu0 0
        %771 = vmatprep.subr.bf16.mxu0 0
        %772 = vmatpush1.bf16.msra.mxu0 0
        %773 = vmatprep.subr.bf16.mxu0 0
        %774 = vmatpush1.bf16.msra.mxu0 0
        %775 = vmatprep.subr.bf16.mxu0 0
        %776 = vmatpush1.bf16.msra.mxu0 0
        %777 = vmatprep.subr.bf16.mxu0 0
        %778 = vmatpush1.bf16.msra.mxu0 %v759
        %779 = vmatprep.subr.bf16.mxu0 0
        %780 = vmatpush1.bf16.msra.mxu0 %v758
        %781 = vmatprep.subr.bf16.mxu0 0
        %782 = vmatpush2.bf16.msra.mxu0 0
        %783 = vmatprep.subr.bf16.mxu0 0
        %784 = vmatpush2.bf16.msra.mxu0 0
        %785 = vmatprep.subr.bf16.mxu0 0
        %786 = vmatpush2.bf16.msra.mxu0 0
        %787 = vmatprep.subr.bf16.mxu0 0
        %788 = vmatpush2.bf16.msra.mxu0 0
        %789 = vmatprep.subr.bf16.mxu0 0
        %790 = vmatpush2.bf16.msra.mxu0 0
        %791 = vmatprep.subr.bf16.mxu0 0
        %792 = vmatpush2.bf16.msra.mxu0 0
        %793 = vmatprep.subr.bf16.mxu0 0
        %794 = vmatpush2.bf16.msra.mxu0 0
        %795 = vmatprep.subr.bf16.mxu0 0
        %796 = vmatpush2.bf16.msra.mxu0 0
        %797 = vmatprep.mubr.bf16.mxu0 0
        %798 = vmatmul.mubr.bf16.gmra.mxu0 %v763
        %v799 = vpop.f32.mrf.mxu0
        %v800 = vadd.f32 0.0, %v799
        %v801 = vpop.f32.mrf.mxu0
        %v802 = vpop.f32.mrf.mxu0
        %v803 = vpop.f32.mrf.mxu0
        %804 = vdwg.mxu0
        %v809 = vunpack.c.l.b16 %v738
        %v810 = vunpack.c.l.b16 %v739
        %v811 = vunpack.c.l.b16 %v740
        %v812 = vunpack.c.l.b16 %v741
        %v813 = vpack.c.b16 %v810, %v809
        %v814 = vpack.c.b16 %v812, %v811
        %817 = vmatprep.subr.bf16.mxu0 0
        %818 = vmatpush1.bf16.msra.mxu0 0
        %819 = vmatprep.subr.bf16.mxu0 0
        %820 = vmatpush1.bf16.msra.mxu0 0
        %821 = vmatprep.subr.bf16.mxu0 0
        %822 = vmatpush1.bf16.msra.mxu0 0
        %823 = vmatprep.subr.bf16.mxu0 0
        %824 = vmatpush1.bf16.msra.mxu0 0
        %825 = vmatprep.subr.bf16.mxu0 0
        %826 = vmatpush1.bf16.msra.mxu0 0
        %827 = vmatprep.subr.bf16.mxu0 0
        %828 = vmatpush1.bf16.msra.mxu0 0
        %829 = vmatprep.subr.bf16.mxu0 0
        %830 = vmatpush1.bf16.msra.mxu0 %v814
        %831 = vmatprep.subr.bf16.mxu0 0
        %832 = vmatpush1.bf16.msra.mxu0 %v813
        %833 = vmatprep.subr.bf16.mxu0 0
        %834 = vmatpush2.bf16.msra.mxu0 0
        %835 = vmatprep.subr.bf16.mxu0 0
        %836 = vmatpush2.bf16.msra.mxu0 0
        %837 = vmatprep.subr.bf16.mxu0 0
        %838 = vmatpush2.bf16.msra.mxu0 0
        %839 = vmatprep.subr.bf16.mxu0 0
        %840 = vmatpush2.bf16.msra.mxu0 0
        %841 = vmatprep.subr.bf16.mxu0 0
        %842 = vmatpush2.bf16.msra.mxu0 0
        %843 = vmatprep.subr.bf16.mxu0 0
        %844 = vmatpush2.bf16.msra.mxu0 0
        %845 = vmatprep.subr.bf16.mxu0 0
        %846 = vmatpush2.bf16.msra.mxu0 0
        %847 = vmatprep.subr.bf16.mxu0 0
        %848 = vmatpush2.bf16.msra.mxu0 0
        %849 = vmatprep.mubr.bf16.mxu0 0
        %850 = vmatmul.mubr.bf16.gmra.mxu0 %v763
        %v851 = vpop.f32.mrf.mxu0
        %v852 = vadd.f32 0.0, %v851
        %v853 = vpop.f32.mrf.mxu0
        %v854 = vpop.f32.mrf.mxu0
        %v855 = vpop.f32.mrf.mxu0
        %856 = vdwg.mxu0
        %v861 = vunpack.c.l.b16 %v742
        %v862 = vunpack.c.l.b16 %v743
        %v863 = vunpack.c.l.b16 %v744
        %v864 = vunpack.c.l.b16 %v745
        %v865 = vpack.c.b16 %v862, %v861
        %v866 = vpack.c.b16 %v864, %v863
        %869 = vmatprep.subr.bf16.mxu0 0
        %870 = vmatpush1.bf16.msra.mxu0 0
        %871 = vmatprep.subr.bf16.mxu0 0
        %872 = vmatpush1.bf16.msra.mxu0 0
        %873 = vmatprep.subr.bf16.mxu0 0
        %874 = vmatpush1.bf16.msra.mxu0 0
        %875 = vmatprep.subr.bf16.mxu0 0
        %876 = vmatpush1.bf16.msra.mxu0 0
        %877 = vmatprep.subr.bf16.mxu0 0
        %878 = vmatpush1.bf16.msra.mxu0 0
        %879 = vmatprep.subr.bf16.mxu0 0
        %880 = vmatpush1.bf16.msra.mxu0 0
        %881 = vmatprep.subr.bf16.mxu0 0
        %882 = vmatpush1.bf16.msra.mxu0 %v866
        %883 = vmatprep.subr.bf16.mxu0 0
        %884 = vmatpush1.bf16.msra.mxu0 %v865
        %885 = vmatprep.subr.bf16.mxu0 0
        %886 = vmatpush2.bf16.msra.mxu0 0
        %887 = vmatprep.subr.bf16.mxu0 0
        %888 = vmatpush2.bf16.msra.mxu0 0
        %889 = vmatprep.subr.bf16.mxu0 0
        %890 = vmatpush2.bf16.msra.mxu0 0
        %891 = vmatprep.subr.bf16.mxu0 0
        %892 = vmatpush2.bf16.msra.mxu0 0
        %893 = vmatprep.subr.bf16.mxu0 0
        %894 = vmatpush2.bf16.msra.mxu0 0
        %895 = vmatprep.subr.bf16.mxu0 0
        %896 = vmatpush2.bf16.msra.mxu0 0
        %897 = vmatprep.subr.bf16.mxu0 0
        %898 = vmatpush2.bf16.msra.mxu0 0
        %899 = vmatprep.subr.bf16.mxu0 0
        %900 = vmatpush2.bf16.msra.mxu0 0
        %901 = vmatprep.mubr.bf16.mxu0 0
        %902 = vmatmul.mubr.bf16.gmra.mxu0 %v763
        %v903 = vpop.f32.mrf.mxu0
        %v904 = vadd.f32 0.0, %v903
        %v905 = vpop.f32.mrf.mxu0
        %v906 = vpop.f32.mrf.mxu0
        %v907 = vpop.f32.mrf.mxu0
        %908 = vdwg.mxu0
        %v913 = vunpack.c.l.b16 %v746
        %v914 = vunpack.c.l.b16 %v747
        %v915 = vunpack.c.l.b16 %v748
        %v916 = vunpack.c.l.b16 %v749
        %v917 = vpack.c.b16 %v914, %v913
        %v918 = vpack.c.b16 %v916, %v915
        %921 = vmatprep.subr.bf16.mxu0 0
        %922 = vmatpush1.bf16.msra.mxu0 0
        %923 = vmatprep.subr.bf16.mxu0 0
        %924 = vmatpush1.bf16.msra.mxu0 0
        %925 = vmatprep.subr.bf16.mxu0 0
        %926 = vmatpush1.bf16.msra.mxu0 0
        %927 = vmatprep.subr.bf16.mxu0 0
        %928 = vmatpush1.bf16.msra.mxu0 0
        %929 = vmatprep.subr.bf16.mxu0 0
        %930 = vmatpush1.bf16.msra.mxu0 0
        %931 = vmatprep.subr.bf16.mxu0 0
        %932 = vmatpush1.bf16.msra.mxu0 0
        %933 = vmatprep.subr.bf16.mxu0 0
        %934 = vmatpush1.bf16.msra.mxu0 %v918
        %935 = vmatprep.subr.bf16.mxu0 0
        %936 = vmatpush1.bf16.msra.mxu0 %v917
        %937 = vmatprep.subr.bf16.mxu0 0
        %938 = vmatpush2.bf16.msra.mxu0 0
        %939 = vmatprep.subr.bf16.mxu0 0
        %940 = vmatpush2.bf16.msra.mxu0 0
        %941 = vmatprep.subr.bf16.mxu0 0
        %942 = vmatpush2.bf16.msra.mxu0 0
        %943 = vmatprep.subr.bf16.mxu0 0
        %944 = vmatpush2.bf16.msra.mxu0 0
        %945 = vmatprep.subr.bf16.mxu0 0
        %946 = vmatpush2.bf16.msra.mxu0 0
        %947 = vmatprep.subr.bf16.mxu0 0
        %948 = vmatpush2.bf16.msra.mxu0 0
        %949 = vmatprep.subr.bf16.mxu0 0
        %950 = vmatpush2.bf16.msra.mxu0 0
        %951 = vmatprep.subr.bf16.mxu0 0
        %952 = vmatpush2.bf16.msra.mxu0 0
        %953 = vmatprep.mubr.bf16.mxu0 0
        %954 = vmatmul.mubr.bf16.gmra.mxu0 %v763
        %v955 = vpop.f32.mrf.mxu0
        %v956 = vadd.f32 0.0, %v955
        %v957 = vpop.f32.mrf.mxu0
        %v958 = vpop.f32.mrf.mxu0
        %v959 = vpop.f32.mrf.mxu0
        %960 = vdwg.mxu0
        %v961 = vld [vmem:[%s657] sm:$0xf]
        %v962 = vld [vmem:[%s657 + $0x4] sm:$0xf]
        %v963 = vld [vmem:[%s657 + $0x8] sm:$0xf]
        %v964 = vld [vmem:[%s657 + $0xc] sm:$0xf]
        %v965 = vld [vmem:[%s657 + $0x10] sm:$0xf]
        %v966 = vld [vmem:[%s657 + $0x14] sm:$0xf]
        %v967 = vld [vmem:[%s657 + $0x18] sm:$0xf]
        %v968 = vld [vmem:[%s657 + $0x1c] sm:$0xf]
        %v969 = vld [vmem:[%s657 + $0x20] sm:$0xf]
        %v970 = vld [vmem:[%s657 + $0x24] sm:$0xf]
        %v971 = vld [vmem:[%s657 + $0x28] sm:$0xf]
        %v972 = vld [vmem:[%s657 + $0x2c] sm:$0xf]
        %v973 = vld [vmem:[%s657 + $0x30] sm:$0xf]
        %v974 = vld [vmem:[%s657 + $0x34] sm:$0xf]
        %v975 = vld [vmem:[%s657 + $0x38] sm:$0xf]
        %v976 = vld [vmem:[%s657 + $0x3c] sm:$0xf]
        %v981 = vunpack.c.l.b16 %v961
        %v982 = vunpack.c.l.b16 %v962
        %v983 = vunpack.c.l.b16 %v963
        %v984 = vunpack.c.l.b16 %v964
        %v985 = vpack.c.b16 %v982, %v981
        %v986 = vpack.c.b16 %v984, %v983
        %989 = vmatprep.subr.bf16.mxu0 0
        %990 = vmatpush1.bf16.msra.mxu0 0
        %991 = vmatprep.subr.bf16.mxu0 0
        %992 = vmatpush1.bf16.msra.mxu0 0
        %993 = vmatprep.subr.bf16.mxu0 0
        %994 = vmatpush1.bf16.msra.mxu0 0
        %995 = vmatprep.subr.bf16.mxu0 0
        %996 = vmatpush1.bf16.msra.mxu0 0
        %997 = vmatprep.subr.bf16.mxu0 0
        %998 = vmatpush1.bf16.msra.mxu0 0
        %999 = vmatprep.subr.bf16.mxu0 0
        %1000 = vmatpush1.bf16.msra.mxu0 0
        %1001 = vmatprep.subr.bf16.mxu0 0
        %1002 = vmatpush1.bf16.msra.mxu0 %v986
        %1003 = vmatprep.subr.bf16.mxu0 0
        %1004 = vmatpush1.bf16.msra.mxu0 %v985
        %1005 = vmatprep.subr.bf16.mxu0 0
        %1006 = vmatpush2.bf16.msra.mxu0 0
        %1007 = vmatprep.subr.bf16.mxu0 0
        %1008 = vmatpush2.bf16.msra.mxu0 0
        %1009 = vmatprep.subr.bf16.mxu0 0
        %1010 = vmatpush2.bf16.msra.mxu0 0
        %1011 = vmatprep.subr.bf16.mxu0 0
        %1012 = vmatpush2.bf16.msra.mxu0 0
        %1013 = vmatprep.subr.bf16.mxu0 0
        %1014 = vmatpush2.bf16.msra.mxu0 0
        %1015 = vmatprep.subr.bf16.mxu0 0
        %1016 = vmatpush2.bf16.msra.mxu0 0
        %1017 = vmatprep.subr.bf16.mxu0 0
        %1018 = vmatpush2.bf16.msra.mxu0 0
        %1019 = vmatprep.subr.bf16.mxu0 0
        %1020 = vmatpush2.bf16.msra.mxu0 0
        %1021 = vmatprep.mubr.bf16.mxu0 0
        %1022 = vmatmul.mubr.bf16.gmra.mxu0 %v763
        %v1023 = vpop.f32.mrf.mxu0
        %v1024 = vadd.f32 0.0, %v1023
        %v1025 = vpop.f32.mrf.mxu0
        %v1026 = vpop.f32.mrf.mxu0
        %v1027 = vpop.f32.mrf.mxu0
        %1028 = vdwg.mxu0
        %v1033 = vunpack.c.l.b16 %v965
        %v1034 = vunpack.c.l.b16 %v966
        %v1035 = vunpack.c.l.b16 %v967
        %v1036 = vunpack.c.l.b16 %v968
        %v1037 = vpack.c.b16 %v1034, %v1033
        %v1038 = vpack.c.b16 %v1036, %v1035
        %1041 = vmatprep.subr.bf16.mxu0 0
        %1042 = vmatpush1.bf16.msra.mxu0 0
        %1043 = vmatprep.subr.bf16.mxu0 0
        %1044 = vmatpush1.bf16.msra.mxu0 0
        %1045 = vmatprep.subr.bf16.mxu0 0
        %1046 = vmatpush1.bf16.msra.mxu0 0
        %1047 = vmatprep.subr.bf16.mxu0 0
        %1048 = vmatpush1.bf16.msra.mxu0 0
        %1049 = vmatprep.subr.bf16.mxu0 0
        %1050 = vmatpush1.bf16.msra.mxu0 0
        %1051 = vmatprep.subr.bf16.mxu0 0
        %1052 = vmatpush1.bf16.msra.mxu0 0
        %1053 = vmatprep.subr.bf16.mxu0 0
        %1054 = vmatpush1.bf16.msra.mxu0 %v1038
        %1055 = vmatprep.subr.bf16.mxu0 0
        %1056 = vmatpush1.bf16.msra.mxu0 %v1037
        %1057 = vmatprep.subr.bf16.mxu0 0
        %1058 = vmatpush2.bf16.msra.mxu0 0
        %1059 = vmatprep.subr.bf16.mxu0 0
        %1060 = vmatpush2.bf16.msra.mxu0 0
        %1061 = vmatprep.subr.bf16.mxu0 0
        %1062 = vmatpush2.bf16.msra.mxu0 0
        %1063 = vmatprep.subr.bf16.mxu0 0
        %1064 = vmatpush2.bf16.msra.mxu0 0
        %1065 = vmatprep.subr.bf16.mxu0 0
        %1066 = vmatpush2.bf16.msra.mxu0 0
        %1067 = vmatprep.subr.bf16.mxu0 0
        %1068 = vmatpush2.bf16.msra.mxu0 0
        %1069 = vmatprep.subr.bf16.mxu0 0
        %1070 = vmatpush2.bf16.msra.mxu0 0
        %1071 = vmatprep.subr.bf16.mxu0 0
        %1072 = vmatpush2.bf16.msra.mxu0 0
        %1073 = vmatprep.mubr.bf16.mxu0 0
        %1074 = vmatmul.mubr.bf16.gmra.mxu0 %v763
        %v1075 = vpop.f32.mrf.mxu0
        %v1076 = vadd.f32 0.0, %v1075
        %v1077 = vpop.f32.mrf.mxu0
        %v1078 = vpop.f32.mrf.mxu0
        %v1079 = vpop.f32.mrf.mxu0
        %1080 = vdwg.mxu0
        %v1085 = vunpack.c.l.b16 %v969
        %v1086 = vunpack.c.l.b16 %v970
        %v1087 = vunpack.c.l.b16 %v971
        %v1088 = vunpack.c.l.b16 %v972
        %v1089 = vpack.c.b16 %v1086, %v1085
        %v1090 = vpack.c.b16 %v1088, %v1087
        %1093 = vmatprep.subr.bf16.mxu0 0
        %1094 = vmatpush1.bf16.msra.mxu0 0
        %1095 = vmatprep.subr.bf16.mxu0 0
        %1096 = vmatpush1.bf16.msra.mxu0 0
        %1097 = vmatprep.subr.bf16.mxu0 0
        %1098 = vmatpush1.bf16.msra.mxu0 0
        %1099 = vmatprep.subr.bf16.mxu0 0
        %1100 = vmatpush1.bf16.msra.mxu0 0
        %1101 = vmatprep.subr.bf16.mxu0 0
        %1102 = vmatpush1.bf16.msra.mxu0 0
        %1103 = vmatprep.subr.bf16.mxu0 0
        %1104 = vmatpush1.bf16.msra.mxu0 0
        %1105 = vmatprep.subr.bf16.mxu0 0
        %1106 = vmatpush1.bf16.msra.mxu0 %v1090
        %1107 = vmatprep.subr.bf16.mxu0 0
        %1108 = vmatpush1.bf16.msra.mxu0 %v1089
        %1109 = vmatprep.subr.bf16.mxu0 0
        %1110 = vmatpush2.bf16.msra.mxu0 0
        %1111 = vmatprep.subr.bf16.mxu0 0
        %1112 = vmatpush2.bf16.msra.mxu0 0
        %1113 = vmatprep.subr.bf16.mxu0 0
        %1114 = vmatpush2.bf16.msra.mxu0 0
        %1115 = vmatprep.subr.bf16.mxu0 0
        %1116 = vmatpush2.bf16.msra.mxu0 0
        %1117 = vmatprep.subr.bf16.mxu0 0
        %1118 = vmatpush2.bf16.msra.mxu0 0
        %1119 = vmatprep.subr.bf16.mxu0 0
        %1120 = vmatpush2.bf16.msra.mxu0 0
        %1121 = vmatprep.subr.bf16.mxu0 0
        %1122 = vmatpush2.bf16.msra.mxu0 0
        %1123 = vmatprep.subr.bf16.mxu0 0
        %1124 = vmatpush2.bf16.msra.mxu0 0
        %1125 = vmatprep.mubr.bf16.mxu0 0
        %1126 = vmatmul.mubr.bf16.gmra.mxu0 %v763
        %v1127 = vpop.f32.mrf.mxu0
        %v1128 = vadd.f32 0.0, %v1127
        %v1129 = vpop.f32.mrf.mxu0
        %v1130 = vpop.f32.mrf.mxu0
        %v1131 = vpop.f32.mrf.mxu0
        %1132 = vdwg.mxu0
        %v1137 = vunpack.c.l.b16 %v973
        %v1138 = vunpack.c.l.b16 %v974
        %v1139 = vunpack.c.l.b16 %v975
        %v1140 = vunpack.c.l.b16 %v976
        %v1141 = vpack.c.b16 %v1138, %v1137
        %v1142 = vpack.c.b16 %v1140, %v1139
        %1145 = vmatprep.subr.bf16.mxu0 0
        %1146 = vmatpush1.bf16.msra.mxu0 0
        %1147 = vmatprep.subr.bf16.mxu0 0
        %1148 = vmatpush1.bf16.msra.mxu0 0
        %1149 = vmatprep.subr.bf16.mxu0 0
        %1150 = vmatpush1.bf16.msra.mxu0 0
        %1151 = vmatprep.subr.bf16.mxu0 0
        %1152 = vmatpush1.bf16.msra.mxu0 0
        %1153 = vmatprep.subr.bf16.mxu0 0
        %1154 = vmatpush1.bf16.msra.mxu0 0
        %1155 = vmatprep.subr.bf16.mxu0 0
        %1156 = vmatpush1.bf16.msra.mxu0 0
        %1157 = vmatprep.subr.bf16.mxu0 0
        %1158 = vmatpush1.bf16.msra.mxu0 %v1142
        %1159 = vmatprep.subr.bf16.mxu0 0
        %1160 = vmatpush1.bf16.msra.mxu0 %v1141
        %1161 = vmatprep.subr.bf16.mxu0 0
        %1162 = vmatpush2.bf16.msra.mxu0 0
        %1163 = vmatprep.subr.bf16.mxu0 0
        %1164 = vmatpush2.bf16.msra.mxu0 0
        %1165 = vmatprep.subr.bf16.mxu0 0
        %1166 = vmatpush2.bf16.msra.mxu0 0
        %1167 = vmatprep.subr.bf16.mxu0 0
        %1168 = vmatpush2.bf16.msra.mxu0 0
        %1169 = vmatprep.subr.bf16.mxu0 0
        %1170 = vmatpush2.bf16.msra.mxu0 0
        %1171 = vmatprep.subr.bf16.mxu0 0
        %1172 = vmatpush2.bf16.msra.mxu0 0
        %1173 = vmatprep.subr.bf16.mxu0 0
        %1174 = vmatpush2.bf16.msra.mxu0 0
        %1175 = vmatprep.subr.bf16.mxu0 0
        %1176 = vmatpush2.bf16.msra.mxu0 0
        %1177 = vmatprep.mubr.bf16.mxu0 0
        %1178 = vmatmul.mubr.bf16.gmra.mxu0 %v763
        %v1179 = vpop.f32.mrf.mxu0
        %v1180 = vadd.f32 0.0, %v1179
        %v1181 = vpop.f32.mrf.mxu0
        %v1182 = vpop.f32.mrf.mxu0
        %v1183 = vpop.f32.mrf.mxu0
        %1184 = vdwg.mxu0
        %v1185 = vld [vmem:[%s662] sm:$0xf]
        %v1186 = vld [vmem:[%s662 + $0x4] sm:$0xf]
        %v1187 = vld [vmem:[%s662 + $0x8] sm:$0xf]
        %v1188 = vld [vmem:[%s662 + $0xc] sm:$0xf]
        %v1189 = vld [vmem:[%s662 + $0x10] sm:$0xf]
        %v1190 = vld [vmem:[%s662 + $0x14] sm:$0xf]
        %v1191 = vld [vmem:[%s662 + $0x18] sm:$0xf]
        %v1192 = vld [vmem:[%s662 + $0x1c] sm:$0xf]
        %v1193 = vld [vmem:[%s662 + $0x20] sm:$0xf]
        %v1194 = vld [vmem:[%s662 + $0x24] sm:$0xf]
        %v1195 = vld [vmem:[%s662 + $0x28] sm:$0xf]
        %v1196 = vld [vmem:[%s662 + $0x2c] sm:$0xf]
        %v1197 = vld [vmem:[%s662 + $0x30] sm:$0xf]
        %v1198 = vld [vmem:[%s662 + $0x34] sm:$0xf]
        %v1199 = vld [vmem:[%s662 + $0x38] sm:$0xf]
        %v1200 = vld [vmem:[%s662 + $0x3c] sm:$0xf]
        %v1205 = vunpack.c.l.b16 %v1185
        %v1206 = vunpack.c.l.b16 %v1186
        %v1207 = vunpack.c.l.b16 %v1187
        %v1208 = vunpack.c.l.b16 %v1188
        %v1209 = vpack.c.b16 %v1206, %v1205
        %v1210 = vpack.c.b16 %v1208, %v1207
        %1213 = vmatprep.subr.bf16.mxu0 0
        %1214 = vmatpush1.bf16.msra.mxu0 0
        %1215 = vmatprep.subr.bf16.mxu0 0
        %1216 = vmatpush1.bf16.msra.mxu0 0
        %1217 = vmatprep.subr.bf16.mxu0 0
        %1218 = vmatpush1.bf16.msra.mxu0 0
        %1219 = vmatprep.subr.bf16.mxu0 0
        %1220 = vmatpush1.bf16.msra.mxu0 0
        %1221 = vmatprep.subr.bf16.mxu0 0
        %1222 = vmatpush1.bf16.msra.mxu0 0
        %1223 = vmatprep.subr.bf16.mxu0 0
        %1224 = vmatpush1.bf16.msra.mxu0 0
        %1225 = vmatprep.subr.bf16.mxu0 0
        %1226 = vmatpush1.bf16.msra.mxu0 %v1210
        %1227 = vmatprep.subr.bf16.mxu0 0
        %1228 = vmatpush1.bf16.msra.mxu0 %v1209
        %1229 = vmatprep.subr.bf16.mxu0 0
        %1230 = vmatpush2.bf16.msra.mxu0 0
        %1231 = vmatprep.subr.bf16.mxu0 0
        %1232 = vmatpush2.bf16.msra.mxu0 0
        %1233 = vmatprep.subr.bf16.mxu0 0
        %1234 = vmatpush2.bf16.msra.mxu0 0
        %1235 = vmatprep.subr.bf16.mxu0 0
        %1236 = vmatpush2.bf16.msra.mxu0 0
        %1237 = vmatprep.subr.bf16.mxu0 0
        %1238 = vmatpush2.bf16.msra.mxu0 0
        %1239 = vmatprep.subr.bf16.mxu0 0
        %1240 = vmatpush2.bf16.msra.mxu0 0
        %1241 = vmatprep.subr.bf16.mxu0 0
        %1242 = vmatpush2.bf16.msra.mxu0 0
        %1243 = vmatprep.subr.bf16.mxu0 0
        %1244 = vmatpush2.bf16.msra.mxu0 0
        %1245 = vmatprep.mubr.bf16.mxu0 0
        %1246 = vmatmul.mubr.bf16.gmra.mxu0 %v763
        %v1247 = vpop.f32.mrf.mxu0
        %v1248 = vadd.f32 0.0, %v1247
        %v1249 = vpop.f32.mrf.mxu0
        %v1250 = vpop.f32.mrf.mxu0
        %v1251 = vpop.f32.mrf.mxu0
        %1252 = vdwg.mxu0
        %v1257 = vunpack.c.l.b16 %v1189
        %v1258 = vunpack.c.l.b16 %v1190
        %v1259 = vunpack.c.l.b16 %v1191
        %v1260 = vunpack.c.l.b16 %v1192
        %v1261 = vpack.c.b16 %v1258, %v1257
        %v1262 = vpack.c.b16 %v1260, %v1259
        %1265 = vmatprep.subr.bf16.mxu0 0
        %1266 = vmatpush1.bf16.msra.mxu0 0
        %1267 = vmatprep.subr.bf16.mxu0 0
        %1268 = vmatpush1.bf16.msra.mxu0 0
        %1269 = vmatprep.subr.bf16.mxu0 0
        %1270 = vmatpush1.bf16.msra.mxu0 0
        %1271 = vmatprep.subr.bf16.mxu0 0
        %1272 = vmatpush1.bf16.msra.mxu0 0
        %1273 = vmatprep.subr.bf16.mxu0 0
        %1274 = vmatpush1.bf16.msra.mxu0 0
        %1275 = vmatprep.subr.bf16.mxu0 0
        %1276 = vmatpush1.bf16.msra.mxu0 0
        %1277 = vmatprep.subr.bf16.mxu0 0
        %1278 = vmatpush1.bf16.msra.mxu0 %v1262
        %1279 = vmatprep.subr.bf16.mxu0 0
        %1280 = vmatpush1.bf16.msra.mxu0 %v1261
        %1281 = vmatprep.subr.bf16.mxu0 0
        %1282 = vmatpush2.bf16.msra.mxu0 0
        %1283 = vmatprep.subr.bf16.mxu0 0
        %1284 = vmatpush2.bf16.msra.mxu0 0
        %1285 = vmatprep.subr.bf16.mxu0 0
        %1286 = vmatpush2.bf16.msra.mxu0 0
        %1287 = vmatprep.subr.bf16.mxu0 0
        %1288 = vmatpush2.bf16.msra.mxu0 0
        %1289 = vmatprep.subr.bf16.mxu0 0
        %1290 = vmatpush2.bf16.msra.mxu0 0
        %1291 = vmatprep.subr.bf16.mxu0 0
        %1292 = vmatpush2.bf16.msra.mxu0 0
        %1293 = vmatprep.subr.bf16.mxu0 0
        %1294 = vmatpush2.bf16.msra.mxu0 0
        %1295 = vmatprep.subr.bf16.mxu0 0
        %1296 = vmatpush2.bf16.msra.mxu0 0
        %1297 = vmatprep.mubr.bf16.mxu0 0
        %1298 = vmatmul.mubr.bf16.gmra.mxu0 %v763
        %v1299 = vpop.f32.mrf.mxu0
        %v1300 = vadd.f32 0.0, %v1299
        %v1301 = vpop.f32.mrf.mxu0
        %v1302 = vpop.f32.mrf.mxu0
        %v1303 = vpop.f32.mrf.mxu0
        %1304 = vdwg.mxu0
        %v1309 = vunpack.c.l.b16 %v1193
        %v1310 = vunpack.c.l.b16 %v1194
        %v1311 = vunpack.c.l.b16 %v1195
        %v1312 = vunpack.c.l.b16 %v1196
        %v1313 = vpack.c.b16 %v1310, %v1309
        %v1314 = vpack.c.b16 %v1312, %v1311
        %1317 = vmatprep.subr.bf16.mxu0 0
        %1318 = vmatpush1.bf16.msra.mxu0 0
        %1319 = vmatprep.subr.bf16.mxu0 0
        %1320 = vmatpush1.bf16.msra.mxu0 0
        %1321 = vmatprep.subr.bf16.mxu0 0
        %1322 = vmatpush1.bf16.msra.mxu0 0
        %1323 = vmatprep.subr.bf16.mxu0 0
        %1324 = vmatpush1.bf16.msra.mxu0 0
        %1325 = vmatprep.subr.bf16.mxu0 0
        %1326 = vmatpush1.bf16.msra.mxu0 0
        %1327 = vmatprep.subr.bf16.mxu0 0
        %1328 = vmatpush1.bf16.msra.mxu0 0
        %1329 = vmatprep.subr.bf16.mxu0 0
        %1330 = vmatpush1.bf16.msra.mxu0 %v1314
        %1331 = vmatprep.subr.bf16.mxu0 0
        %1332 = vmatpush1.bf16.msra.mxu0 %v1313
        %1333 = vmatprep.subr.bf16.mxu0 0
        %1334 = vmatpush2.bf16.msra.mxu0 0
        %1335 = vmatprep.subr.bf16.mxu0 0
        %1336 = vmatpush2.bf16.msra.mxu0 0
        %1337 = vmatprep.subr.bf16.mxu0 0
        %1338 = vmatpush2.bf16.msra.mxu0 0
        %1339 = vmatprep.subr.bf16.mxu0 0
        %1340 = vmatpush2.bf16.msra.mxu0 0
        %1341 = vmatprep.subr.bf16.mxu0 0
        %1342 = vmatpush2.bf16.msra.mxu0 0
        %1343 = vmatprep.subr.bf16.mxu0 0
        %1344 = vmatpush2.bf16.msra.mxu0 0
        %1345 = vmatprep.subr.bf16.mxu0 0
        %1346 = vmatpush2.bf16.msra.mxu0 0
        %1347 = vmatprep.subr.bf16.mxu0 0
        %1348 = vmatpush2.bf16.msra.mxu0 0
        %1349 = vmatprep.mubr.bf16.mxu0 0
        %1350 = vmatmul.mubr.bf16.gmra.mxu0 %v763
        %v1351 = vpop.f32.mrf.mxu0
        %v1352 = vadd.f32 0.0, %v1351
        %v1353 = vpop.f32.mrf.mxu0
        %v1354 = vpop.f32.mrf.mxu0
        %v1355 = vpop.f32.mrf.mxu0
        %1356 = vdwg.mxu0
        %v1361 = vunpack.c.l.b16 %v1197
        %v1362 = vunpack.c.l.b16 %v1198
        %v1363 = vunpack.c.l.b16 %v1199
        %v1364 = vunpack.c.l.b16 %v1200
        %v1365 = vpack.c.b16 %v1362, %v1361
        %v1366 = vpack.c.b16 %v1364, %v1363
        %1369 = vmatprep.subr.bf16.mxu0 0
        %1370 = vmatpush1.bf16.msra.mxu0 0
        %1371 = vmatprep.subr.bf16.mxu0 0
        %1372 = vmatpush1.bf16.msra.mxu0 0
        %1373 = vmatprep.subr.bf16.mxu0 0
        %1374 = vmatpush1.bf16.msra.mxu0 0
        %1375 = vmatprep.subr.bf16.mxu0 0
        %1376 = vmatpush1.bf16.msra.mxu0 0
        %1377 = vmatprep.subr.bf16.mxu0 0
        %1378 = vmatpush1.bf16.msra.mxu0 0
        %1379 = vmatprep.subr.bf16.mxu0 0
        %1380 = vmatpush1.bf16.msra.mxu0 0
        %1381 = vmatprep.subr.bf16.mxu0 0
        %1382 = vmatpush1.bf16.msra.mxu0 %v1366
        %1383 = vmatprep.subr.bf16.mxu0 0
        %1384 = vmatpush1.bf16.msra.mxu0 %v1365
        %1385 = vmatprep.subr.bf16.mxu0 0
        %1386 = vmatpush2.bf16.msra.mxu0 0
        %1387 = vmatprep.subr.bf16.mxu0 0
        %1388 = vmatpush2.bf16.msra.mxu0 0
        %1389 = vmatprep.subr.bf16.mxu0 0
        %1390 = vmatpush2.bf16.msra.mxu0 0
        %1391 = vmatprep.subr.bf16.mxu0 0
        %1392 = vmatpush2.bf16.msra.mxu0 0
        %1393 = vmatprep.subr.bf16.mxu0 0
        %1394 = vmatpush2.bf16.msra.mxu0 0
        %1395 = vmatprep.subr.bf16.mxu0 0
        %1396 = vmatpush2.bf16.msra.mxu0 0
        %1397 = vmatprep.subr.bf16.mxu0 0
        %1398 = vmatpush2.bf16.msra.mxu0 0
        %1399 = vmatprep.subr.bf16.mxu0 0
        %1400 = vmatpush2.bf16.msra.mxu0 0
        %1401 = vmatprep.mubr.bf16.mxu0 0
        %1402 = vmatmul.mubr.bf16.gmra.mxu0 %v763
        %v1403 = vpop.f32.mrf.mxu0
        %v1404 = vadd.f32 0.0, %v1403
        %v1405 = vpop.f32.mrf.mxu0
        %v1406 = vpop.f32.mrf.mxu0
        %v1407 = vpop.f32.mrf.mxu0
        %1408 = vdwg.mxu0
        %v1409 = vpack.c.bf16 %v800, %v800
        %v1410 = vpack.c.bf16 %v852, %v852
        %v1411 = vpack.c.bf16 %v904, %v904
        %v1412 = vpack.c.bf16 %v956, %v956
        %v1413 = vpack.c.bf16 %v1024, %v1024
        %v1414 = vpack.c.bf16 %v1076, %v1076
        %v1415 = vpack.c.bf16 %v1128, %v1128
        %v1416 = vpack.c.bf16 %v1180, %v1180
        %vm1417 = vcmask 130048
        %v1419 = vsel %vm1417, %v1409, 0
        %v1422 = vsel %vm1417, %v1413, 0
        %1424 = vmatprep.subr.bf16.mxu0 0
        %1425 = vmatpush1.bf16.xpose.msra.mxu0 0
        %1426 = vmatprep.subr.bf16.mxu0 0
        %1427 = vmatpush1.bf16.xpose.msra.mxu0 0
        %1428 = vmatprep.subr.bf16.mxu0 0
        %1429 = vmatpush1.bf16.xpose.msra.mxu0 0
        %1430 = vmatprep.subr.bf16.mxu0 0
        %1431 = vmatpush1.bf16.xpose.msra.mxu0 0
        %1432 = vmatprep.subr.bf16.mxu0 0
        %1433 = vmatpush1.bf16.xpose.msra.mxu0 0
        %1434 = vmatprep.subr.bf16.mxu0 0
        %1435 = vmatpush1.bf16.xpose.msra.mxu0 0
        %1436 = vmatprep.subr.bf16.mxu0 0
        %1437 = vmatpush1.bf16.xpose.msra.mxu0 0
        %1438 = vmatprep.subr.bf16.mxu0 0
        %1439 = vmatpush1.bf16.xpose.msra.mxu0 %v1422
        %1440 = vmatprep.subr.bf16.mxu0 0
        %1441 = vmatpush2.bf16.xpose.msra.mxu0 0
        %1442 = vmatprep.subr.bf16.mxu0 0
        %1443 = vmatpush2.bf16.xpose.msra.mxu0 0
        %1444 = vmatprep.subr.bf16.mxu0 0
        %1445 = vmatpush2.bf16.xpose.msra.mxu0 0
        %1446 = vmatprep.subr.bf16.mxu0 0
        %1447 = vmatpush2.bf16.xpose.msra.mxu0 0
        %1448 = vmatprep.subr.bf16.mxu0 0
        %1449 = vmatpush2.bf16.xpose.msra.mxu0 0
        %1450 = vmatprep.subr.bf16.mxu0 0
        %1451 = vmatpush2.bf16.xpose.msra.mxu0 0
        %1452 = vmatprep.subr.bf16.mxu0 0
        %1453 = vmatpush2.bf16.xpose.msra.mxu0 0
        %1454 = vmatprep.subr.bf16.mxu0 0
        %1455 = vmatpush2.bf16.xpose.msra.mxu0 0
        %1456 = vmatprep.mubr.bf16.mxu0 0
        %1457 = vmatmul.mubr.bf16.gmra.mxu0 %v1419
        %v1458 = vpop.f32.mrf.mxu0
        %v1459 = vadd.f32 0.0, %v1458
        %v1460 = vpop.f32.mrf.mxu0
        %v1461 = vpop.f32.mrf.mxu0
        %v1462 = vpop.f32.mrf.mxu0
        %1463 = vdwg.mxu0
        %v1465 = vsel %vm1417, %v1410, 0
        %v1468 = vsel %vm1417, %v1414, 0
        %1470 = vmatprep.subr.bf16.mxu0 0
        %1471 = vmatpush1.bf16.xpose.msra.mxu0 0
        %1472 = vmatprep.subr.bf16.mxu0 0
        %1473 = vmatpush1.bf16.xpose.msra.mxu0 0
        %1474 = vmatprep.subr.bf16.mxu0 0
        %1475 = vmatpush1.bf16.xpose.msra.mxu0 0
        %1476 = vmatprep.subr.bf16.mxu0 0
        %1477 = vmatpush1.bf16.xpose.msra.mxu0 0
        %1478 = vmatprep.subr.bf16.mxu0 0
        %1479 = vmatpush1.bf16.xpose.msra.mxu0 0
        %1480 = vmatprep.subr.bf16.mxu0 0
        %1481 = vmatpush1.bf16.xpose.msra.mxu0 0
        %1482 = vmatprep.subr.bf16.mxu0 0
        %1483 = vmatpush1.bf16.xpose.msra.mxu0 0
        %1484 = vmatprep.subr.bf16.mxu0 0
        %1485 = vmatpush1.bf16.xpose.msra.mxu0 %v1468
        %1486 = vmatprep.subr.bf16.mxu0 0
        %1487 = vmatpush2.bf16.xpose.msra.mxu0 0
        %1488 = vmatprep.subr.bf16.mxu0 0
        %1489 = vmatpush2.bf16.xpose.msra.mxu0 0
        %1490 = vmatprep.subr.bf16.mxu0 0
        %1491 = vmatpush2.bf16.xpose.msra.mxu0 0
        %1492 = vmatprep.subr.bf16.mxu0 0
        %1493 = vmatpush2.bf16.xpose.msra.mxu0 0
        %1494 = vmatprep.subr.bf16.mxu0 0
        %1495 = vmatpush2.bf16.xpose.msra.mxu0 0
        %1496 = vmatprep.subr.bf16.mxu0 0
        %1497 = vmatpush2.bf16.xpose.msra.mxu0 0
        %1498 = vmatprep.subr.bf16.mxu0 0
        %1499 = vmatpush2.bf16.xpose.msra.mxu0 0
        %1500 = vmatprep.subr.bf16.mxu0 0
        %1501 = vmatpush2.bf16.xpose.msra.mxu0 0
        %1502 = vmatprep.mubr.bf16.mxu0 0
        %1503 = vmatmul.mubr.bf16.gmra.mxu0 %v1465
        %v1504 = vpop.f32.mrf.mxu0
        %v1505 = vadd.f32 0.0, %v1504
        %v1506 = vpop.f32.mrf.mxu0
        %v1507 = vpop.f32.mrf.mxu0
        %v1508 = vpop.f32.mrf.mxu0
        %1509 = vdwg.mxu0
        %v1511 = vsel %vm1417, %v1411, 0
        %v1514 = vsel %vm1417, %v1415, 0
        %1516 = vmatprep.subr.bf16.mxu0 0
        %1517 = vmatpush1.bf16.xpose.msra.mxu0 0
        %1518 = vmatprep.subr.bf16.mxu0 0
        %1519 = vmatpush1.bf16.xpose.msra.mxu0 0
        %1520 = vmatprep.subr.bf16.mxu0 0
        %1521 = vmatpush1.bf16.xpose.msra.mxu0 0
        %1522 = vmatprep.subr.bf16.mxu0 0
        %1523 = vmatpush1.bf16.xpose.msra.mxu0 0
        %1524 = vmatprep.subr.bf16.mxu0 0
        %1525 = vmatpush1.bf16.xpose.msra.mxu0 0
        %1526 = vmatprep.subr.bf16.mxu0 0
        %1527 = vmatpush1.bf16.xpose.msra.mxu0 0
        %1528 = vmatprep.subr.bf16.mxu0 0
        %1529 = vmatpush1.bf16.xpose.msra.mxu0 0
        %1530 = vmatprep.subr.bf16.mxu0 0
        %1531 = vmatpush1.bf16.xpose.msra.mxu0 %v1514
        %1532 = vmatprep.subr.bf16.mxu0 0
        %1533 = vmatpush2.bf16.xpose.msra.mxu0 0
        %1534 = vmatprep.subr.bf16.mxu0 0
        %1535 = vmatpush2.bf16.xpose.msra.mxu0 0
        %1536 = vmatprep.subr.bf16.mxu0 0
        %1537 = vmatpush2.bf16.xpose.msra.mxu0 0
        %1538 = vmatprep.subr.bf16.mxu0 0
        %1539 = vmatpush2.bf16.xpose.msra.mxu0 0
        %1540 = vmatprep.subr.bf16.mxu0 0
        %1541 = vmatpush2.bf16.xpose.msra.mxu0 0
        %1542 = vmatprep.subr.bf16.mxu0 0
        %1543 = vmatpush2.bf16.xpose.msra.mxu0 0
        %1544 = vmatprep.subr.bf16.mxu0 0
        %1545 = vmatpush2.bf16.xpose.msra.mxu0 0
        %1546 = vmatprep.subr.bf16.mxu0 0
        %1547 = vmatpush2.bf16.xpose.msra.mxu0 0
        %1548 = vmatprep.mubr.bf16.mxu0 0
        %1549 = vmatmul.mubr.bf16.gmra.mxu0 %v1511
        %v1550 = vpop.f32.mrf.mxu0
        %v1551 = vadd.f32 0.0, %v1550
        %v1552 = vpop.f32.mrf.mxu0
        %v1553 = vpop.f32.mrf.mxu0
        %v1554 = vpop.f32.mrf.mxu0
        %1555 = vdwg.mxu0
        %v1557 = vsel %vm1417, %v1412, 0
        %v1560 = vsel %vm1417, %v1416, 0
        %1562 = vmatprep.subr.bf16.mxu0 0
        %1563 = vmatpush1.bf16.xpose.msra.mxu0 0
        %1564 = vmatprep.subr.bf16.mxu0 0
        %1565 = vmatpush1.bf16.xpose.msra.mxu0 0
        %1566 = vmatprep.subr.bf16.mxu0 0
        %1567 = vmatpush1.bf16.xpose.msra.mxu0 0
        %1568 = vmatprep.subr.bf16.mxu0 0
        %1569 = vmatpush1.bf16.xpose.msra.mxu0 0
        %1570 = vmatprep.subr.bf16.mxu0 0
        %1571 = vmatpush1.bf16.xpose.msra.mxu0 0
        %1572 = vmatprep.subr.bf16.mxu0 0
        %1573 = vmatpush1.bf16.xpose.msra.mxu0 0
        %1574 = vmatprep.subr.bf16.mxu0 0
        %1575 = vmatpush1.bf16.xpose.msra.mxu0 0
        %1576 = vmatprep.subr.bf16.mxu0 0
        %1577 = vmatpush1.bf16.xpose.msra.mxu0 %v1560
        %1578 = vmatprep.subr.bf16.mxu0 0
        %1579 = vmatpush2.bf16.xpose.msra.mxu0 0
        %1580 = vmatprep.subr.bf16.mxu0 0
        %1581 = vmatpush2.bf16.xpose.msra.mxu0 0
        %1582 = vmatprep.subr.bf16.mxu0 0
        %1583 = vmatpush2.bf16.xpose.msra.mxu0 0
        %1584 = vmatprep.subr.bf16.mxu0 0
        %1585 = vmatpush2.bf16.xpose.msra.mxu0 0
        %1586 = vmatprep.subr.bf16.mxu0 0
        %1587 = vmatpush2.bf16.xpose.msra.mxu0 0
        %1588 = vmatprep.subr.bf16.mxu0 0
        %1589 = vmatpush2.bf16.xpose.msra.mxu0 0
        %1590 = vmatprep.subr.bf16.mxu0 0
        %1591 = vmatpush2.bf16.xpose.msra.mxu0 0
        %1592 = vmatprep.subr.bf16.mxu0 0
        %1593 = vmatpush2.bf16.xpose.msra.mxu0 0
        %1594 = vmatprep.mubr.bf16.mxu0 0
        %1595 = vmatmul.mubr.bf16.gmra.mxu0 %v1557
        %v1596 = vpop.f32.mrf.mxu0
        %v1597 = vadd.f32 0.0, %v1596
        %v1598 = vpop.f32.mrf.mxu0
        %v1599 = vpop.f32.mrf.mxu0
        %v1600 = vpop.f32.mrf.mxu0
        %1601 = vdwg.mxu0
        %vm1602 = vcmask 64512
        %v1603 = vsel %vm1602, %v1459, -inf
        %1604 = vmax.xlane.f32.xlu0 %v1603
        %v1605 = vpop.xlane.xlu0 %1604
        %v1606 = vsel %vm1602, %v1505, -inf
        %1607 = vmax.xlane.f32.xlu0 %v1606
        %v1608 = vpop.xlane.xlu0 %1607
        %v1609 = vsel %vm1602, %v1551, -inf
        %1610 = vmax.xlane.f32.xlu0 %v1609
        %v1611 = vpop.xlane.xlu0 %1610
        %v1612 = vsel %vm1602, %v1597, -inf
        %1613 = vmax.xlane.f32.xlu0 %v1612
        %v1614 = vpop.xlane.xlu0 %1613
        %v1615 = vsub.f32 %v1459, %v1605
        %v1616 = vsub.f32 %v1505, %v1608
        %v1617 = vsub.f32 %v1551, %v1611
        %v1618 = vsub.f32 %v1597, %v1614
        %v1619 = vmul.f32 %v1615, 1.442695
        %v1620 = vpow.pop %v1619
        %v1621 = vmul.f32 %v1616, 1.442695
        %v1622 = vpow.pop %v1621
        %v1623 = vmul.f32 %v1617, 1.442695
        %v1624 = vpow.pop %v1623
        %v1625 = vmul.f32 %v1618, 1.442695
        %v1626 = vpow.pop %v1625
        %v1627 = vsel %vm1602, %v1620, 0.0
        %1628 = vadd.xlane.f32.xlu0 %v1627
        %v1629 = vpop.xlane.xlu0 %1628
        %v1630 = vsel %vm1602, %v1622, 0.0
        %1631 = vadd.xlane.f32.xlu0 %v1630
        %v1632 = vpop.xlane.xlu0 %1631
        %v1633 = vsel %vm1602, %v1624, 0.0
        %1634 = vadd.xlane.f32.xlu0 %v1633
        %v1635 = vpop.xlane.xlu0 %1634
        %v1636 = vsel %vm1602, %v1626, 0.0
        %1637 = vadd.xlane.f32.xlu0 %v1636
        %v1638 = vpop.xlane.xlu0 %1637
        %v1639 = vrcp.pop %v1629
        %v1640 = vrcp.pop %v1632
        %v1641 = vrcp.pop %v1635
        %v1642 = vrcp.pop %v1638
        %v1643 = vmul.f32 %v1620, %v1639
        %v1644 = vmul.f32 %v1622, %v1640
        %v1645 = vmul.f32 %v1624, %v1641
        %v1646 = vmul.f32 %v1626, %v1642
        %v1647 = vpack.c.bf16 %v1643, %v1643
        %v1648 = vpack.c.bf16 %v1644, %v1644
        %v1649 = vpack.c.bf16 %v1645, %v1645
        %v1650 = vpack.c.bf16 %v1646, %v1646
        %v1651 = vpack.c.bf16 %v1248, %v1248
        %v1652 = vpack.c.bf16 %v1300, %v1300
        %v1653 = vpack.c.bf16 %v1352, %v1352
        %v1654 = vpack.c.bf16 %v1404, %v1404
        %v1656 = vsel %vm1602, %v1647, 0
        %vm1658 = vcmask 1043456
        %v1660 = vsel %vm1658, %v1651, 0
        %1662 = vmatprep.subr.bf16.mxu0 0
        %1663 = vmatpush1.bf16.msra.mxu0 0
        %1664 = vmatprep.subr.bf16.mxu0 0
        %1665 = vmatpush1.bf16.msra.mxu0 0
        %1666 = vmatprep.subr.bf16.mxu0 0
        %1667 = vmatpush1.bf16.msra.mxu0 0
        %1668 = vmatprep.subr.bf16.mxu0 0
        %1669 = vmatpush1.bf16.msra.mxu0 0
        %1670 = vmatprep.subr.bf16.mxu0 0
        %1671 = vmatpush1.bf16.msra.mxu0 0
        %1672 = vmatprep.subr.bf16.mxu0 0
        %1673 = vmatpush1.bf16.msra.mxu0 0
        %1674 = vmatprep.subr.bf16.mxu0 0
        %1675 = vmatpush1.bf16.msra.mxu0 0
        %1676 = vmatprep.subr.bf16.mxu0 0
        %1677 = vmatpush1.bf16.msra.mxu0 %v1660
        %1678 = vmatprep.subr.bf16.mxu0 0
        %1679 = vmatpush2.bf16.msra.mxu0 0
        %1680 = vmatprep.subr.bf16.mxu0 0
        %1681 = vmatpush2.bf16.msra.mxu0 0
        %1682 = vmatprep.subr.bf16.mxu0 0
        %1683 = vmatpush2.bf16.msra.mxu0 0
        %1684 = vmatprep.subr.bf16.mxu0 0
        %1685 = vmatpush2.bf16.msra.mxu0 0
        %1686 = vmatprep.subr.bf16.mxu0 0
        %1687 = vmatpush2.bf16.msra.mxu0 0
        %1688 = vmatprep.subr.bf16.mxu0 0
        %1689 = vmatpush2.bf16.msra.mxu0 0
        %1690 = vmatprep.subr.bf16.mxu0 0
        %1691 = vmatpush2.bf16.msra.mxu0 0
        %1692 = vmatprep.subr.bf16.mxu0 0
        %1693 = vmatpush2.bf16.msra.mxu0 0
        %1694 = vmatprep.mubr.bf16.mxu0 0
        %1695 = vmatmul.mubr.bf16.gmra.mxu0 %v1656
        %v1696 = vpop.f32.mrf.mxu0
        %v1697 = vadd.f32 0.0, %v1696
        %v1698 = vpop.f32.mrf.mxu0
        %v1699 = vpop.f32.mrf.mxu0
        %v1700 = vpop.f32.mrf.mxu0
        %1701 = vdwg.mxu0
        %v1703 = vsel %vm1602, %v1648, 0
        %v1706 = vsel %vm1658, %v1652, 0
        %1708 = vmatprep.subr.bf16.mxu0 0
        %1709 = vmatpush1.bf16.msra.mxu0 0
        %1710 = vmatprep.subr.bf16.mxu0 0
        %1711 = vmatpush1.bf16.msra.mxu0 0
        %1712 = vmatprep.subr.bf16.mxu0 0
        %1713 = vmatpush1.bf16.msra.mxu0 0
        %1714 = vmatprep.subr.bf16.mxu0 0
        %1715 = vmatpush1.bf16.msra.mxu0 0
        %1716 = vmatprep.subr.bf16.mxu0 0
        %1717 = vmatpush1.bf16.msra.mxu0 0
        %1718 = vmatprep.subr.bf16.mxu0 0
        %1719 = vmatpush1.bf16.msra.mxu0 0
        %1720 = vmatprep.subr.bf16.mxu0 0
        %1721 = vmatpush1.bf16.msra.mxu0 0
        %1722 = vmatprep.subr.bf16.mxu0 0
        %1723 = vmatpush1.bf16.msra.mxu0 %v1706
        %1724 = vmatprep.subr.bf16.mxu0 0
        %1725 = vmatpush2.bf16.msra.mxu0 0
        %1726 = vmatprep.subr.bf16.mxu0 0
        %1727 = vmatpush2.bf16.msra.mxu0 0
        %1728 = vmatprep.subr.bf16.mxu0 0
        %1729 = vmatpush2.bf16.msra.mxu0 0
        %1730 = vmatprep.subr.bf16.mxu0 0
        %1731 = vmatpush2.bf16.msra.mxu0 0
        %1732 = vmatprep.subr.bf16.mxu0 0
        %1733 = vmatpush2.bf16.msra.mxu0 0
        %1734 = vmatprep.subr.bf16.mxu0 0
        %1735 = vmatpush2.bf16.msra.mxu0 0
        %1736 = vmatprep.subr.bf16.mxu0 0
        %1737 = vmatpush2.bf16.msra.mxu0 0
        %1738 = vmatprep.subr.bf16.mxu0 0
        %1739 = vmatpush2.bf16.msra.mxu0 0
        %1740 = vmatprep.mubr.bf16.mxu0 0
        %1741 = vmatmul.mubr.bf16.gmra.mxu0 %v1703
        %v1742 = vpop.f32.mrf.mxu0
        %v1743 = vadd.f32 0.0, %v1742
        %v1744 = vpop.f32.mrf.mxu0
        %v1745 = vpop.f32.mrf.mxu0
        %v1746 = vpop.f32.mrf.mxu0
        %1747 = vdwg.mxu0
        %v1749 = vsel %vm1602, %v1649, 0
        %v1752 = vsel %vm1658, %v1653, 0
        %1754 = vmatprep.subr.bf16.mxu0 0
        %1755 = vmatpush1.bf16.msra.mxu0 0
        %1756 = vmatprep.subr.bf16.mxu0 0
        %1757 = vmatpush1.bf16.msra.mxu0 0
        %1758 = vmatprep.subr.bf16.mxu0 0
        %1759 = vmatpush1.bf16.msra.mxu0 0
        %1760 = vmatprep.subr.bf16.mxu0 0
        %1761 = vmatpush1.bf16.msra.mxu0 0
        %1762 = vmatprep.subr.bf16.mxu0 0
        %1763 = vmatpush1.bf16.msra.mxu0 0
        %1764 = vmatprep.subr.bf16.mxu0 0
        %1765 = vmatpush1.bf16.msra.mxu0 0
        %1766 = vmatprep.subr.bf16.mxu0 0
        %1767 = vmatpush1.bf16.msra.mxu0 0
        %1768 = vmatprep.subr.bf16.mxu0 0
        %1769 = vmatpush1.bf16.msra.mxu0 %v1752
        %1770 = vmatprep.subr.bf16.mxu0 0
        %1771 = vmatpush2.bf16.msra.mxu0 0
        %1772 = vmatprep.subr.bf16.mxu0 0
        %1773 = vmatpush2.bf16.msra.mxu0 0
        %1774 = vmatprep.subr.bf16.mxu0 0
        %1775 = vmatpush2.bf16.msra.mxu0 0
        %1776 = vmatprep.subr.bf16.mxu0 0
        %1777 = vmatpush2.bf16.msra.mxu0 0
        %1778 = vmatprep.subr.bf16.mxu0 0
        %1779 = vmatpush2.bf16.msra.mxu0 0
        %1780 = vmatprep.subr.bf16.mxu0 0
        %1781 = vmatpush2.bf16.msra.mxu0 0
        %1782 = vmatprep.subr.bf16.mxu0 0
        %1783 = vmatpush2.bf16.msra.mxu0 0
        %1784 = vmatprep.subr.bf16.mxu0 0
        %1785 = vmatpush2.bf16.msra.mxu0 0
        %1786 = vmatprep.mubr.bf16.mxu0 0
        %1787 = vmatmul.mubr.bf16.gmra.mxu0 %v1749
        %v1788 = vpop.f32.mrf.mxu0
        %v1789 = vadd.f32 0.0, %v1788
        %v1790 = vpop.f32.mrf.mxu0
        %v1791 = vpop.f32.mrf.mxu0
        %v1792 = vpop.f32.mrf.mxu0
        %1793 = vdwg.mxu0
        %v1795 = vsel %vm1602, %v1650, 0
        %v1798 = vsel %vm1658, %v1654, 0
        %1800 = vmatprep.subr.bf16.mxu0 0
        %1801 = vmatpush1.bf16.msra.mxu0 0
        %1802 = vmatprep.subr.bf16.mxu0 0
        %1803 = vmatpush1.bf16.msra.mxu0 0
        %1804 = vmatprep.subr.bf16.mxu0 0
        %1805 = vmatpush1.bf16.msra.mxu0 0
        %1806 = vmatprep.subr.bf16.mxu0 0
        %1807 = vmatpush1.bf16.msra.mxu0 0
        %1808 = vmatprep.subr.bf16.mxu0 0
        %1809 = vmatpush1.bf16.msra.mxu0 0
        %1810 = vmatprep.subr.bf16.mxu0 0
        %1811 = vmatpush1.bf16.msra.mxu0 0
        %1812 = vmatprep.subr.bf16.mxu0 0
        %1813 = vmatpush1.bf16.msra.mxu0 0
        %1814 = vmatprep.subr.bf16.mxu0 0
        %1815 = vmatpush1.bf16.msra.mxu0 %v1798
        %1816 = vmatprep.subr.bf16.mxu0 0
        %1817 = vmatpush2.bf16.msra.mxu0 0
        %1818 = vmatprep.subr.bf16.mxu0 0
        %1819 = vmatpush2.bf16.msra.mxu0 0
        %1820 = vmatprep.subr.bf16.mxu0 0
        %1821 = vmatpush2.bf16.msra.mxu0 0
        %1822 = vmatprep.subr.bf16.mxu0 0
        %1823 = vmatpush2.bf16.msra.mxu0 0
        %1824 = vmatprep.subr.bf16.mxu0 0
        %1825 = vmatpush2.bf16.msra.mxu0 0
        %1826 = vmatprep.subr.bf16.mxu0 0
        %1827 = vmatpush2.bf16.msra.mxu0 0
        %1828 = vmatprep.subr.bf16.mxu0 0
        %1829 = vmatpush2.bf16.msra.mxu0 0
        %1830 = vmatprep.subr.bf16.mxu0 0
        %1831 = vmatpush2.bf16.msra.mxu0 0
        %1832 = vmatprep.mubr.bf16.mxu0 0
        %1833 = vmatmul.mubr.bf16.gmra.mxu0 %v1795
        %v1834 = vpop.f32.mrf.mxu0
        %v1835 = vadd.f32 0.0, %v1834
        %v1836 = vpop.f32.mrf.mxu0
        %v1837 = vpop.f32.mrf.mxu0
        %v1838 = vpop.f32.mrf.mxu0
        %1839 = vdwg.mxu0
        %v1840 = vpack.c.bf16 %v1697, %v1697
        %vm1841 = vcmask 125952
        %1842 = vst.msk [vmem:[#allocation3] sm:$0xf] %vm1841, %v1840
        %v1843 = vpack.c.bf16 %v1743, %v1743
        %v1845 = vunpack.c.l.b16 %v1843
        %v1846 = vpack.c.b16 %v1845, %v1845
        %1847 = vrot.lane.b32.xlu0 %v1846, 16
        %v1848 = vpop.permute.xlu0 %1847
        %vm1850 = vcmask 257152
        %1851 = vst.msk [vmem:[#allocation3] sm:$0xf] %vm1850, %v1848
        %v1852 = vpack.c.bf16 %v1789, %v1789
        %v1854 = vunpack.c.l.b16 %v1852
        %v1855 = vpack.c.b16 %v1854, %v1854
        %1856 = vrot.lane.b32.xlu0 %v1855, 32
        %v1857 = vpop.permute.xlu0 %1856
        %vm1859 = vcmask 388352
        %1860 = vst.msk [vmem:[#allocation3] sm:$0xf] %vm1859, %v1857
        %v1861 = vpack.c.bf16 %v1835, %v1835
        %v1863 = vunpack.c.l.b16 %v1861
        %v1864 = vpack.c.b16 %v1863, %v1863
        %1865 = vrot.lane.b32.xlu0 %v1864, 48
        %v1866 = vpop.permute.xlu0 %1865
        %vm1868 = vcmask 519552
        %1869 = vst.msk [vmem:[#allocation3] sm:$0xf] %vm1868, %v1866
        %v1870 = vld [vmem:[#allocation3] sm:$0xf]
        %v1871 = vld [vmem:[%s667] sm:$0xf]
        %v1872 = vld [vmem:[%s667 + $0x4] sm:$0xf]
        %v1873 = vld [vmem:[%s667 + $0x8] sm:$0xf]
        %v1874 = vld [vmem:[%s667 + $0xc] sm:$0xf]
        %v1875 = vld [vmem:[%s667 + $0x10] sm:$0xf]
        %v1876 = vld [vmem:[%s667 + $0x14] sm:$0xf]
        %v1877 = vld [vmem:[%s667 + $0x18] sm:$0xf]
        %v1878 = vld [vmem:[%s667 + $0x1c] sm:$0xf]
        %v1887 = vunpack.c.l.b16 %v1871
        %v1888 = vunpack.c.l.b16 %v1872
        %v1889 = vunpack.c.l.b16 %v1873
        %v1890 = vunpack.c.l.b16 %v1874
        %v1891 = vunpack.c.l.b16 %v1875
        %v1892 = vunpack.c.l.b16 %v1876
        %v1893 = vunpack.c.l.b16 %v1877
        %v1894 = vunpack.c.l.b16 %v1878
        %v1895 = vpack.c.b16 %v1888, %v1887
        %v1896 = vpack.c.b16 %v1890, %v1889
        %v1897 = vpack.c.b16 %v1892, %v1891
        %v1898 = vpack.c.b16 %v1894, %v1893
        %vm1903 = vcmask 523264
        %v1905 = vsel %vm1903, %v1870, 0
        %1907 = vmatprep.subr.bf16.mxu0 0
        %1908 = vmatpush1.bf16.msra.mxu0 0
        %1909 = vmatprep.subr.bf16.mxu0 0
        %1910 = vmatpush1.bf16.msra.mxu0 0
        %1911 = vmatprep.subr.bf16.mxu0 0
        %1912 = vmatpush1.bf16.msra.mxu0 0
        %1913 = vmatprep.subr.bf16.mxu0 0
        %1914 = vmatpush1.bf16.msra.mxu0 0
        %1915 = vmatprep.subr.bf16.mxu0 0
        %1916 = vmatpush1.bf16.msra.mxu0 %v1898
        %1917 = vmatprep.subr.bf16.mxu0 0
        %1918 = vmatpush1.bf16.msra.mxu0 %v1897
        %1919 = vmatprep.subr.bf16.mxu0 0
        %1920 = vmatpush1.bf16.msra.mxu0 %v1896
        %1921 = vmatprep.subr.bf16.mxu0 0
        %1922 = vmatpush1.bf16.msra.mxu0 %v1895
        %1923 = vmatprep.subr.bf16.mxu0 0
        %1924 = vmatpush2.bf16.msra.mxu0 0
        %1925 = vmatprep.subr.bf16.mxu0 0
        %1926 = vmatpush2.bf16.msra.mxu0 0
        %1927 = vmatprep.subr.bf16.mxu0 0
        %1928 = vmatpush2.bf16.msra.mxu0 0
        %1929 = vmatprep.subr.bf16.mxu0 0
        %1930 = vmatpush2.bf16.msra.mxu0 0
        %1931 = vmatprep.subr.bf16.mxu0 0
        %1932 = vmatpush2.bf16.msra.mxu0 0
        %1933 = vmatprep.subr.bf16.mxu0 0
        %1934 = vmatpush2.bf16.msra.mxu0 0
        %1935 = vmatprep.subr.bf16.mxu0 0
        %1936 = vmatpush2.bf16.msra.mxu0 0
        %1937 = vmatprep.subr.bf16.mxu0 0
        %1938 = vmatpush2.bf16.msra.mxu0 0
        %1939 = vmatprep.mubr.bf16.mxu0 0
        %1940 = vmatmul.mubr.bf16.gmra.mxu0 %v1905
        %v1941 = vpop.f32.mrf.mxu0
        %v1942 = vadd.f32 0.0, %v1941
        %v1943 = vpop.f32.mrf.mxu0
        %v1944 = vpop.f32.mrf.mxu0
        %v1945 = vpop.f32.mrf.mxu0
        %1946 = vdwg.mxu0
        %v1947 = vadd.f32 %v701, %v1942
        %v1948 = vld [vmem:[%s670] sm:$0x1]
        %v1950 = vlaneseq
        %v1951 = vshrl.u32 %v1950, 7
        %v1952 = vsub.s32 0, %v1951
        %v1953 = vrot.slane %v1948, %v1952
        %v1955 = vadd.f32 %v1947, %v1953
        %v1956 = vld [vmem:[%s673] sm:$0x1]
        %v1957 = vld [vmem:[%s676] sm:$0x1]
        %v1958 = vsel %vm704, %v1955, 0.0
        %1959 = vadd.xlane.f32.xlu0 %v1958
        %v1960 = vpop.xlane.xlu0 %1959
        %v1961 = vmul.f32 %v1960, %v708
        %v1962 = vsub.f32 %v1955, %v1961
        %v1963 = vmul.f32 %v1962, %v1962
        %v1964 = vsel %vm704, %v1963, 0.0
        %1965 = vadd.xlane.f32.xlu0 %v1964
        %v1966 = vpop.xlane.xlu0 %1965
        %v1967 = vmul.f32 %v1966, %v708
        %v1968 = vadd.f32 %v1967, 1e-05
        %v1969 = vrsqrt.pop %v1968
        %v1970 = vmul.f32 %v1962, %v1969
        %v1972 = vlaneseq
        %v1973 = vshrl.u32 %v1972, 7
        %v1974 = vsub.s32 0, %v1973
        %v1975 = vrot.slane %v1956, %v1974
        %v1977 = vmul.f32 %v1970, %v1975
        %v1979 = vlaneseq
        %v1980 = vshrl.u32 %v1979, 7
        %v1981 = vsub.s32 0, %v1980
        %v1982 = vrot.slane %v1957, %v1981
        %v1984 = vadd.f32 %v1977, %v1982
        %v1985 = vpack.c.bf16 %v1984, %v1984
        %v1986 = vld [vmem:[%s681] sm:$0xf]
        %v1987 = vld [vmem:[%s681 + $0x4] sm:$0xf]
        %v1988 = vld [vmem:[%s681 + $0x8] sm:$0xf]
        %v1989 = vld [vmem:[%s681 + $0xc] sm:$0xf]
        %v1990 = vld [vmem:[%s684] sm:$0x1]
        %v1992 = vlaneseq
        %v1993 = vshrl.u32 %v1992, 7
        %v1994 = vsub.s32 0, %v1993
        %v1995 = vrot.slane %v1990, %v1994
        %v2001 = vunpack.c.l.b16 %v1986
        %v2002 = vunpack.c.l.b16 %v1987
        %v2003 = vunpack.c.l.b16 %v1988
        %v2004 = vunpack.c.l.b16 %v1989
        %v2005 = vpack.c.b16 %v2002, %v2001
        %v2006 = vpack.c.b16 %v2004, %v2003
        %v2010 = vsel %vm704, %v1985, 0
        %2012 = vmatprep.subr.bf16.mxu0 0
        %2013 = vmatpush1.bf16.msra.mxu0 0
        %2014 = vmatprep.subr.bf16.mxu0 0
        %2015 = vmatpush1.bf16.msra.mxu0 0
        %2016 = vmatprep.subr.bf16.mxu0 0
        %2017 = vmatpush1.bf16.msra.mxu0 0
        %2018 = vmatprep.subr.bf16.mxu0 0
        %2019 = vmatpush1.bf16.msra.mxu0 0
        %2020 = vmatprep.subr.bf16.mxu0 0
        %2021 = vmatpush1.bf16.msra.mxu0 0
        %2022 = vmatprep.subr.bf16.mxu0 0
        %2023 = vmatpush1.bf16.msra.mxu0 0
        %2024 = vmatprep.subr.bf16.mxu0 0
        %2025 = vmatpush1.bf16.msra.mxu0 %v2006
        %2026 = vmatprep.subr.bf16.mxu0 0
        %2027 = vmatpush1.bf16.msra.mxu0 %v2005
        %2028 = vmatprep.subr.bf16.mxu0 0
        %2029 = vmatpush2.bf16.msra.mxu0 0
        %2030 = vmatprep.subr.bf16.mxu0 0
        %2031 = vmatpush2.bf16.msra.mxu0 0
        %2032 = vmatprep.subr.bf16.mxu0 0
        %2033 = vmatpush2.bf16.msra.mxu0 0
        %2034 = vmatprep.subr.bf16.mxu0 0
        %2035 = vmatpush2.bf16.msra.mxu0 0
        %2036 = vmatprep.subr.bf16.mxu0 0
        %2037 = vmatpush2.bf16.msra.mxu0 0
        %2038 = vmatprep.subr.bf16.mxu0 0
        %2039 = vmatpush2.bf16.msra.mxu0 0
        %2040 = vmatprep.subr.bf16.mxu0 0
        %2041 = vmatpush2.bf16.msra.mxu0 0
        %2042 = vmatprep.subr.bf16.mxu0 0
        %2043 = vmatpush2.bf16.msra.mxu0 0
        %2044 = vmatprep.mubr.bf16.mxu0 0
        %2045 = vmatmul.mubr.bf16.gmra.mxu0 %v2010
        %v2046 = vpop.f32.mrf.mxu0
        %v2047 = vadd.f32 %v1995, %v2046
        %v2048 = vpop.f32.mrf.mxu0
        %v2049 = vpop.f32.mrf.mxu0
        %v2050 = vpop.f32.mrf.mxu0
        %2051 = vdwg.mxu0
        %v2052 = vmul.f32 %v2047, 0.5
        %v2053 = vmul.f32 %v2047, 0.70710677
        %v2054 = verf.f32.pop %v2053
        %v2055 = vadd.f32 %v2054, 1.0
        %v2056 = vmul.f32 %v2052, %v2055
        %v2057 = vpack.c.bf16 %v2056, %v2056
        %v2058 = vld [vmem:[%s689] sm:$0xf]
        %v2059 = vld [vmem:[%s689 + $0x4] sm:$0xf]
        %v2060 = vld [vmem:[%s689 + $0x8] sm:$0xf]
        %v2061 = vld [vmem:[%s689 + $0xc] sm:$0xf]
        %v2062 = vld [vmem:[%s689 + $0x10] sm:$0xf]
        %v2063 = vld [vmem:[%s689 + $0x14] sm:$0xf]
        %v2064 = vld [vmem:[%s689 + $0x18] sm:$0xf]
        %v2065 = vld [vmem:[%s689 + $0x1c] sm:$0xf]
        %v2074 = vunpack.c.l.b16 %v2058
        %v2075 = vunpack.c.l.b16 %v2059
        %v2076 = vunpack.c.l.b16 %v2060
        %v2077 = vunpack.c.l.b16 %v2061
        %v2078 = vunpack.c.l.b16 %v2062
        %v2079 = vunpack.c.l.b16 %v2063
        %v2080 = vunpack.c.l.b16 %v2064
        %v2081 = vunpack.c.l.b16 %v2065
        %v2082 = vpack.c.b16 %v2075, %v2074
        %v2083 = vpack.c.b16 %v2077, %v2076
        %v2084 = vpack.c.b16 %v2079, %v2078
        %v2085 = vpack.c.b16 %v2081, %v2080
        %v2091 = vsel %vm1903, %v2057, 0
        %2093 = vmatprep.subr.bf16.mxu0 0
        %2094 = vmatpush1.bf16.msra.mxu0 0
        %2095 = vmatprep.subr.bf16.mxu0 0
        %2096 = vmatpush1.bf16.msra.mxu0 0
        %2097 = vmatprep.subr.bf16.mxu0 0
        %2098 = vmatpush1.bf16.msra.mxu0 0
        %2099 = vmatprep.subr.bf16.mxu0 0
        %2100 = vmatpush1.bf16.msra.mxu0 0
        %2101 = vmatprep.subr.bf16.mxu0 0
        %2102 = vmatpush1.bf16.msra.mxu0 %v2085
        %2103 = vmatprep.subr.bf16.mxu0 0
        %2104 = vmatpush1.bf16.msra.mxu0 %v2084
        %2105 = vmatprep.subr.bf16.mxu0 0
        %2106 = vmatpush1.bf16.msra.mxu0 %v2083
        %2107 = vmatprep.subr.bf16.mxu0 0
        %2108 = vmatpush1.bf16.msra.mxu0 %v2082
        %2109 = vmatprep.subr.bf16.mxu0 0
        %2110 = vmatpush2.bf16.msra.mxu0 0
        %2111 = vmatprep.subr.bf16.mxu0 0
        %2112 = vmatpush2.bf16.msra.mxu0 0
        %2113 = vmatprep.subr.bf16.mxu0 0
        %2114 = vmatpush2.bf16.msra.mxu0 0
        %2115 = vmatprep.subr.bf16.mxu0 0
        %2116 = vmatpush2.bf16.msra.mxu0 0
        %2117 = vmatprep.subr.bf16.mxu0 0
        %2118 = vmatpush2.bf16.msra.mxu0 0
        %2119 = vmatprep.subr.bf16.mxu0 0
        %2120 = vmatpush2.bf16.msra.mxu0 0
        %2121 = vmatprep.subr.bf16.mxu0 0
        %2122 = vmatpush2.bf16.msra.mxu0 0
        %2123 = vmatprep.subr.bf16.mxu0 0
        %2124 = vmatpush2.bf16.msra.mxu0 0
        %2125 = vmatprep.mubr.bf16.mxu0 0
        %2126 = vmatmul.mubr.bf16.gmra.mxu0 %v2091
        %v2127 = vpop.f32.mrf.mxu0
        %v2128 = vadd.f32 0.0, %v2127
        %v2129 = vpop.f32.mrf.mxu0
        %v2130 = vpop.f32.mrf.mxu0
        %v2131 = vpop.f32.mrf.mxu0
        %2132 = vdwg.mxu0
        %v2133 = vadd.f32 %v1955, %v2128
        %v2134 = vld [vmem:[%s692] sm:$0x1]
        %v2136 = vlaneseq
        %v2137 = vshrl.u32 %v2136, 7
        %v2138 = vsub.s32 0, %v2137
        %v2139 = vrot.slane %v2134, %v2138
        %v2141 = vadd.f32 %v2133, %v2139
        %2142 = vst.msk [vmem:[#allocation2] sm:$0xff] %vm704, %v2141
        %p2143 = scmp.eq.s32.totalorder %s33, 1
        // Predicated region
        $region81: #{tpu_custom_call.1} parent=75 // pred_check
          %p2144 = pneg %p2143
        $region82: #{tpu_custom_call.1} parent=75 // pred_check_branch
          %2146 = sbr.rel (%p2144) target = $region84
        $region83: #{tpu_custom_call.1} parent=75 // pred_region
          %v2147 = vld [vmem:[#allocation2] sm:$0xff]
          %2148 = vst.msk [vmem:[%s637] sm:$0xff] %vm704, %v2147
        $region84: #{tpu_custom_call.1} parent=75 // pred_fallthru
          _
        %s2149 = sand.u32 %s412, 1
        %s2150 = scalar_lea.sflag [#allocation5], %s2149
        %s2151 = sand.u32 %s412, 1
        %s2152 = smul.addr %s2151, 8
        %s2153 = scalar_lea.vmem [#allocation4], %s2152
        // Predicated region
        $region85: #{tpu_custom_call.1} parent=75 // pred_check
          %p2154 = pneg %p422
        $region86: #{tpu_custom_call.1} parent=75 // pred_check_branch
          %2156 = sbr.rel (%p2154) target = $region88
        $region87: #{tpu_custom_call.1} parent=75 // pred_region
          %s2158 = ssub.s32 128, 128
          %2159 = vsyncadd %s2150, %s2158
          %s2160 = smul.addr %s32, 128
          %s2161 = scalar_lea.hbm %s14, %s2160
          %s2163 = sshll.u32 %s2153, 4
          %s2164 = int_to_ptr.vmem [resolvable:$true] %s2163
          %2166 = dma.vmem_to_hbm [thread:$0]  %s2164, 128, %s2161, %s2150
        $region88: #{tpu_custom_call.1} parent=75 // pred_fallthru
          _
      $region76: #{tpu_custom_call.1} parent=5 // pred_fallthru
        _
      %p2167 = scmp.le.s32.totalorder 2, %s23
      // Predicated region
      $region89: #{tpu_custom_call.1} parent=5 // pred_check
        %p2168 = pneg %p2167
      $region90: #{tpu_custom_call.1} parent=5 // pred_check_branch
        %2170 = sbr.rel (%p2168) target = $region92
      $region91: #{tpu_custom_call.1} parent=5 // pred_region
        %s2171 = ssub.s32 %s23, 2
        // Predicated region
        $region93: #{tpu_custom_call.1} parent=91 // pred_check
          %p2172 = pneg %p428
        $region94: #{tpu_custom_call.1} parent=91 // pred_check_branch
          %2174 = sbr.rel (%p2172) target = $region96
        $region95: #{tpu_custom_call.1} parent=91 // pred_region
          %s2175 = sand.u32 %s413, 1
          %s2176 = scalar_lea.sflag [#allocation5], %s2175
          %s2177 = sand.u32 %s413, 1
          %s2178 = smul.addr %s2177, 8
          %s2179 = scalar_lea.vmem [#allocation4], %s2178
          %2180 = dma.done %s2176, 128
        $region96: #{tpu_custom_call.1} parent=91 // pred_fallthru
          _
      $region92: #{tpu_custom_call.1} parent=5 // pred_fallthru
        _
    $region6: #{tpu_custom_call.1} parent=1 // loop_footer
      %s27 = sadd.s32 1, %s23
    $region7: #{tpu_custom_call.1} parent=1 // loop_footer_branch
      %22 = sbr.rel target = $region3
    $region8: #{tpu_custom_call.1} parent=1 // loop_exit
      _
    %2181 = vsyncpa [#allocation5], 1
    %s2182 = scalar_lea.sflag [#allocation5], 1
    %2183 = vsyncpa %s2182, 1

</llo_original>
